<compile_context>
chip_gen: v5e
topology: v5e:2x2
jax: 0.10.0
libtpu: 0.0.40
codegen_flags: <defaults>
</compile_context>

<pallas_src>
import jax
import jax.numpy as jnp
from jax.experimental import pallas as pl
from jax.experimental.pallas import tpu as pltpu


# ----------------------------- Pallas kernel -------------------------------- #
def vae_kernel(
    x_ref, eps_ref,
    w1_ref, b1_ref,          # encoder hidden layer (bf16 w, f32 b)
    wml_ref, bml_ref,        # fused [mu | log-var] head (HID, 2Z)
    wd1_ref, bd1_ref,        # decoder hidden layer
    wd2_ref, bd2_ref,        # decoder output layer
    pred_ref, mulv_ref,      # pred: (TB, D_in) bf16; mulv: (TB, 2Z) f32 = [mu | logvar]
):
    z_dim = eps_ref.shape[-1]

    x = x_ref[...]                                                   # (TB, D_in) bf16

    # ---- encoder hidden: bf16 matmul, f32 accumulate; ReLU fused with downcast ----
    h = jnp.dot(x, w1_ref[...], preferred_element_type=jnp.float32) + b1_ref[...]
    h = jnp.maximum(h, 0.0).astype(jnp.bfloat16)

    # ---- fused mu | log-var head: single (HID, 2Z) matmul ----
    ml = jnp.dot(h, wml_ref[...], preferred_element_type=jnp.float32) + bml_ref[...]
    z_mu = ml[:, :z_dim]
    z_var = ml[:, z_dim:]                                            # log-variance

    # ---- reparameterization: std = exp(z_var / 2); x_sample = eps * std + z_mu ----
    std = jnp.exp(z_var * 0.5)                                       # EUP
    x_sample = eps_ref[...] * std + z_mu                             # f32

    # ---- decoder ----
    hd = jnp.dot(x_sample.astype(jnp.bfloat16), wd1_ref[...],
                 preferred_element_type=jnp.float32) + bd1_ref[...]
    hd = jnp.maximum(hd, 0.0).astype(jnp.bfloat16)
    logits = jnp.dot(hd, wd2_ref[...],
                     preferred_element_type=jnp.float32) + bd2_ref[...]

    # Sigmoid: exp on the EUP; exact reciprocal for the output layer (BCE stability
    # near 0/1 — the approximate reciprocal's ~1e-3 rel error gets amplified there).
    pred = pl.reciprocal(1.0 + jnp.exp(-logits), approx=False)

    pred_ref[...] = pred.astype(pred_ref.dtype)                      # bf16 writeback
    mulv_ref[...] = ml.astype(mulv_ref.dtype)                        # [mu | logvar] f32


# ------------------------------- Wrapper ------------------------------------ #
def vae_forward(x_nchw, eps, params, *, tb=None):
    """x_nchw: [B, C, H, W] float32; eps: [B, Z] float32; params: dict of f32 weights.

    Returns (predicted [B,C,H,W] bf16, z_mu [B,Z] f32, z_var [B,Z] f32).
    """
    B, C, H, W = x_nchw.shape
    D_in = C * H * W
    Z = eps.shape[1]
    HID = params["w1"].shape[1]

    # Size tb so the grid has >= 2 steps (lets the output DMA of step i-1 hide under
    # step i's matmuls, and gives each v7x core multiple pipelined steps), while keeping
    # tb a multiple of 8 for sublane alignment.
    if tb is None:
        tb = min(128, B)
        while tb > 8 and (B // tb) < 2:
            tb //= 2
    tb = max(8, min(tb, B))
    assert B % tb == 0, "batch must be divisible by the batch tile"
    grid = (B // tb,)

    # Activations for the first matmul go in as bf16 (halves HBM traffic);
    # eps stays f32 (elementwise-only).
    x_flat = x_nchw.reshape(B, D_in).astype(jnp.bfloat16)
    eps = eps.astype(jnp.float32)

    # Pre-cast weights to bf16 (MXU-native path) and fuse the mu/log-var heads.
    w1 = params["w1"].astype(jnp.bfloat16)
    wml = jnp.concatenate([params["wmu"], params["wlv"]], axis=1).astype(jnp.bfloat16)
    wd1 = params["wd1"].astype(jnp.bfloat16)
    wd2 = params["wd2"].astype(jnp.bfloat16)
    # Biases stay f32 and are added post-accumulation.
    b1 = params["b1"].astype(jnp.float32)
    bml = jnp.concatenate([params["bmu"], params["blv"]], axis=1).astype(jnp.float32)
    bd1 = params["bd1"].astype(jnp.float32)
    bd2 = params["bd2"].astype(jnp.float32)

    # Batch-tiled specs for activations/outputs (default double-buffered pipeline);
    # weights/biases resident across the whole grid -> single-buffered.
    def batch_spec(nf):
        return pl.BlockSpec((tb, nf), lambda i: (i, 0))

    def resident(shape):
        return pl.BlockSpec(shape, lambda i: (0, 0), pipeline_mode=pl.Buffered(1))

    # ---- explicit VMEM budget: residents (1x) + streamed tiles (2x) + headroom ----
    nbytes = lambda a: a.size * a.dtype.itemsize
    resident_bytes = sum(nbytes(a) for a in (w1, b1, wml, bml, wd1, bd1, wd2, bd2))
    streamed_bytes = 2 * tb * (D_in * 2 + Z * 4          # x (bf16), eps (f32) in
                               + D_in * 2 + 2 * Z * 4)   # pred (bf16), mulv (f32) out
    try:
        vmem_cap = pltpu.get_tpu_info().vmem_capacity_bytes
    except Exception:
        vmem_cap = 64 * 1024 * 1024                      # conservative (v7x per-TC)
    vmem_limit_bytes = int(1.25 * (resident_bytes + streamed_bytes)) + (8 << 20)
    vmem_limit_bytes = max(16 << 20, min(vmem_limit_bytes, int(0.9 * vmem_cap)))

    flops = 2 * B * (D_in * HID + HID * (2 * Z) + Z * HID + HID * D_in)
    transcendentals = B * (Z + 2 * D_in)                 # exp(std) + sigmoid exp/recip
    bytes_accessed = (
        x_flat.size * 2 + eps.size * 4
        + (w1.size + wml.size + wd1.size + wd2.size) * 2
        + (b1.size + bml.size + bd1.size + bd2.size) * 4
        + B * D_in * 2 + B * 2 * Z * 4
    )

    # TODO(synk): gen-conditional scaling path for DeepLense-size D_in/HID — when
    # 1x(w1+wd2) bf16 + streamed tiles exceed ~24 MiB (v7x: 64 MiB physical / 32 MiB
    # scoped default), add a second "arbitrary" grid axis that tiles w1 along K with an
    # f32 accumulator scratch (pl.when init/finalize) and wd2 along N with >=512-wide
    # lane-dense output blocks; keep this fully-resident path on v5e/v6e up to ~2x that.
    # TODO(synk): if Z or D_in are not multiples of 128, pad them in the wrapper so the
    # in-kernel lane slice of `ml` and the output stores stay unmasked.
    pred_flat, mulv = pl.pallas_call(
        vae_kernel,
        grid_spec=pltpu.PrefetchScalarGridSpec(
            num_scalar_prefetch=0,
            grid=grid,
            in_specs=[
                batch_spec(D_in),         # x
                batch_spec(Z),            # eps
                resident((D_in, HID)),    # w1
                resident((1, HID)),       # b1
                resident((HID, 2 * Z)),   # wml (fused mu|logvar)
                resident((1, 2 * Z)),     # bml
                resident((Z, HID)),       # wd1
                resident((1, HID)),       # bd1
                resident((HID, D_in)),    # wd2
                resident((1, D_in)),      # bd2
            ],
            out_specs=[
                batch_spec(D_in),         # predicted (flat, bf16)
                batch_spec(2 * Z),        # fused [mu | logvar] (f32)
            ],
        ),
        out_shape=(
            jax.ShapeDtypeStruct((B, D_in), jnp.bfloat16),
            jax.ShapeDtypeStruct((B, 2 * Z), jnp.float32),
        ),
        compiler_params=pltpu.CompilerParams(
            dimension_semantics=("parallel",),           # megacore-shard the batch axis
            vmem_limit_bytes=vmem_limit_bytes,
        ),
        cost_estimate=pl.CostEstimate(
            flops=int(flops),
            transcendentals=int(transcendentals),
            bytes_accessed=int(bytes_accessed),
        ),
    )(x_flat, eps, w1, b1, wml, bml, wd1, bd1, wd2, bd2)

    predicted = pred_flat.reshape(B, C, H, W)            # bf16 (feed the loss in bf16)
    z_mu = mulv[:, :Z]
    z_var = mulv[:, Z:]
    return predicted, z_mu, z_var


# ------------------------- Pure-JAX reference (for checking) ----------------- #
def vae_reference(x_nchw, eps, params):
    B, C, H, W = x_nchw.shape
    D_in = C * H * W
    x = x_nchw.reshape(B, D_in).astype(jnp.bfloat16)

    h = jnp.dot(x, params["w1"].astype(jnp.bfloat16),
                preferred_element_type=jnp.float32) + params["b1"]
    h = jnp.maximum(h, 0.0)
    z_mu = jnp.dot(h.astype(jnp.bfloat16), params["wmu"].astype(jnp.bfloat16),
                   preferred_element_type=jnp.float32) + params["bmu"]
    z_var = jnp.dot(h.astype(jnp.bfloat16), params["wlv"].astype(jnp.bfloat16),
                    preferred_element_type=jnp.float32) + params["blv"]
    std = jnp.exp(z_var * 0.5)
    x_sample = eps * std + z_mu
    hd = jnp.dot(x_sample.astype(jnp.bfloat16), params["wd1"].astype(jnp.bfloat16),
                 preferred_element_type=jnp.float32) + params["bd1"]
    hd = jnp.maximum(hd, 0.0)
    logits = jnp.dot(hd.astype(jnp.bfloat16), params["wd2"].astype(jnp.bfloat16),
                     preferred_element_type=jnp.float32) + params["bd2"]
    pred = jax.nn.sigmoid(logits)
    return pred.reshape(B, C, H, W), z_mu, z_var


# -------------------------- Deterministic params ----------------------------- #
def init_params(key, d_in, hid, z):
    ks = jax.random.split(key, 5)
    scale = 0.05
    return {
        "w1":  scale * jax.random.normal(ks[0], (d_in, hid), jnp.float32),
        "b1":  jnp.zeros((1, hid), jnp.float32),
        "wmu": scale * jax.random.normal(ks[1], (hid, z), jnp.float32),
        "bmu": jnp.zeros((1, z), jnp.float32),
        "wlv": scale * jax.random.normal(ks[2], (hid, z), jnp.float32),
        "blv": jnp.zeros((1, z), jnp.float32),
        "wd1": scale * jax.random.normal(ks[3], (z, hid), jnp.float32),
        "bd1": jnp.zeros((1, hid), jnp.float32),
        "wd2": scale * jax.random.normal(ks[4], (hid, d_in), jnp.float32),
        "bd2": jnp.zeros((1, d_in), jnp.float32),
    }


if __name__ == "__main__":
    # Small, lane-aligned shapes: batch=64 (tiled 32 rows/program -> grid=(2,)),
    # 1x16x16 images -> D_in=256, hidden=256, latent=128.
    B, C, H, W = 64, 1, 16, 16
    D_in, HID, Z = C * H * W, 256, 128

    key = jax.random.PRNGKey(0)
    k_x, k_eps, k_p = jax.random.split(key, 3)

    x = jax.random.uniform(k_x, (B, C, H, W), jnp.float32)      # image input, NCHW
    eps = jax.random.normal(k_eps, (B, Z), jnp.float32)         # reparam noise
    params = init_params(k_p, D_in, HID, Z)

    predicted, z_mu, z_var = vae_forward(x, eps, params)
    jax.block_until_ready((predicted, z_mu, z_var))

    # sanity: correct shapes and finite values
    assert predicted.shape == (B, C, H, W)
    assert z_mu.shape == (B, Z) and z_var.shape == (B, Z)
    assert bool(jnp.all(jnp.isfinite(predicted.astype(jnp.float32))))
    assert bool(jnp.all(jnp.isfinite(z_mu)))
    assert bool(jnp.all(jnp.isfinite(z_var)))

    # compare against pure-JAX reference (same bf16 matmul path; tolerance covers the
    # bf16 pred writeback)
    pred_ref, mu_ref, lv_ref = vae_reference(x, eps, params)
    assert bool(jnp.allclose(predicted.astype(jnp.float32), pred_ref, atol=5e-2, rtol=5e-2))
    assert bool(jnp.allclose(z_mu, mu_ref, atol=5e-2, rtol=5e-2))
    assert bool(jnp.allclose(z_var, lv_ref, atol=5e-2, rtol=5e-2))

    print("KERNEL_OK")
</pallas_src>

<mosaic_0001>
module attributes {stable_mosaic.version = 11 : i64} {
  func.func @vae_kernel(%arg0: i32, %arg1: memref<32x256xbf16, #tpu.memory_space<vmem>>, %arg2: memref<32x128xf32, #tpu.memory_space<vmem>>, %arg3: memref<256x256xbf16, #tpu.memory_space<vmem>>, %arg4: memref<1x256xf32, #tpu.memory_space<vmem>>, %arg5: memref<256x256xbf16, #tpu.memory_space<vmem>>, %arg6: memref<1x256xf32, #tpu.memory_space<vmem>>, %arg7: memref<128x256xbf16, #tpu.memory_space<vmem>>, %arg8: memref<1x256xf32, #tpu.memory_space<vmem>>, %arg9: memref<256x256xbf16, #tpu.memory_space<vmem>>, %arg10: memref<1x256xf32, #tpu.memory_space<vmem>>, %arg11: memref<32x256xbf16, #tpu.memory_space<vmem>>, %arg12: memref<32x256xf32, #tpu.memory_space<vmem>>) attributes {dimension_semantics = [#tpu.dimension_semantics<parallel>], iteration_bounds = array<i64: 2>, scalar_prefetch = 0 : i64, scratch_operands = 0 : i64, tpu.core_type = #tpu.core_type<tc>, window_params = [{transform_indices = @transform_0, window_bounds = array<i64: 32, 256>}, {transform_indices = @transform_1, window_bounds = array<i64: 32, 128>}, {pipeline_mode = #tpu.pipeline_mode<synchronous>, transform_indices = @transform_2, window_bounds = array<i64: 256, 256>}, {pipeline_mode = #tpu.pipeline_mode<synchronous>, transform_indices = @transform_3, window_bounds = array<i64: 1, 256>}, {pipeline_mode = #tpu.pipeline_mode<synchronous>, transform_indices = @transform_4, window_bounds = array<i64: 256, 256>}, {pipeline_mode = #tpu.pipeline_mode<synchronous>, transform_indices = @transform_5, window_bounds = array<i64: 1, 256>}, {pipeline_mode = #tpu.pipeline_mode<synchronous>, transform_indices = @transform_6, window_bounds = array<i64: 128, 256>}, {pipeline_mode = #tpu.pipeline_mode<synchronous>, transform_indices = @transform_7, window_bounds = array<i64: 1, 256>}, {pipeline_mode = #tpu.pipeline_mode<synchronous>, transform_indices = @transform_8, window_bounds = array<i64: 256, 256>}, {pipeline_mode = #tpu.pipeline_mode<synchronous>, transform_indices = @transform_9, window_bounds = array<i64: 1, 256>}, {transform_indices = @transform_10, window_bounds = array<i64: 32, 256>}, {transform_indices = @transform_11, window_bounds = array<i64: 32, 256>}]} {
    %c0 = arith.constant 0 : index
    %c0_0 = arith.constant 0 : index
    %0 = vector.load %arg1[%c0, %c0_0] : memref<32x256xbf16, #tpu.memory_space<vmem>>, vector<32x256xbf16>
    %c0_1 = arith.constant 0 : index
    %c0_2 = arith.constant 0 : index
    %1 = vector.load %arg3[%c0_1, %c0_2] : memref<256x256xbf16, #tpu.memory_space<vmem>>, vector<256x256xbf16>
    %cst = arith.constant dense<0.000000e+00> : vector<32x256xf32>
    %2 = tpu.matmul %0, %1, %cst {dimension_numbers = #tpu.dot_dimension_numbers<[1], [0], [0], [1], [0, 0, 1, 1], [], []>} : vector<32x256xbf16>, vector<256x256xbf16>, vector<32x256xf32> -> vector<32x256xf32>
    %c0_3 = arith.constant 0 : index
    %c0_4 = arith.constant 0 : index
    %3 = vector.load %arg4[%c0_3, %c0_4] : memref<1x256xf32, #tpu.memory_space<vmem>>, vector<1x256xf32>
    %4 = vector.broadcast %3 : vector<1x256xf32> to vector<32x256xf32>
    %5 = arith.addf %2, %4 : vector<32x256xf32>
    %cst_5 = arith.constant 0.000000e+00 : f32
    %6 = vector.broadcast %cst_5 : f32 to vector<32x256xf32>
    %7 = arith.maximumf %5, %6 : vector<32x256xf32>
    %8 = arith.truncf %7 : vector<32x256xf32> to vector<32x256xbf16>
    %c0_6 = arith.constant 0 : index
    %c0_7 = arith.constant 0 : index
    %9 = vector.load %arg5[%c0_6, %c0_7] : memref<256x256xbf16, #tpu.memory_space<vmem>>, vector<256x256xbf16>
    %cst_8 = arith.constant dense<0.000000e+00> : vector<32x256xf32>
    %10 = tpu.matmul %8, %9, %cst_8 {dimension_numbers = #tpu.dot_dimension_numbers<[1], [0], [0], [1], [0, 0, 1, 1], [], []>} : vector<32x256xbf16>, vector<256x256xbf16>, vector<32x256xf32> -> vector<32x256xf32>
    %c0_9 = arith.constant 0 : index
    %c0_10 = arith.constant 0 : index
    %11 = vector.load %arg6[%c0_9, %c0_10] : memref<1x256xf32, #tpu.memory_space<vmem>>, vector<1x256xf32>
    %12 = vector.broadcast %11 : vector<1x256xf32> to vector<32x256xf32>
    %13 = arith.addf %10, %12 : vector<32x256xf32>
    %14 = vector.extract_strided_slice %13 {offsets = [0, 0], sizes = [32, 128], strides = [1, 1]} : vector<32x256xf32> to vector<32x128xf32>
    %15 = vector.extract_strided_slice %13 {offsets = [0, 128], sizes = [32, 128], strides = [1, 1]} : vector<32x256xf32> to vector<32x128xf32>
    %cst_11 = arith.constant 5.000000e-01 : f32
    %16 = vector.broadcast %cst_11 : f32 to vector<32x128xf32>
    %17 = arith.mulf %15, %16 : vector<32x128xf32>
    %18 = math.exp %17 : vector<32x128xf32>
    %c0_12 = arith.constant 0 : index
    %c0_13 = arith.constant 0 : index
    %19 = vector.load %arg2[%c0_12, %c0_13] : memref<32x128xf32, #tpu.memory_space<vmem>>, vector<32x128xf32>
    %20 = arith.mulf %19, %18 : vector<32x128xf32>
    %21 = arith.addf %20, %14 : vector<32x128xf32>
    %22 = arith.truncf %21 : vector<32x128xf32> to vector<32x128xbf16>
    %c0_14 = arith.constant 0 : index
    %c0_15 = arith.constant 0 : index
    %23 = vector.load %arg7[%c0_14, %c0_15] : memref<128x256xbf16, #tpu.memory_space<vmem>>, vector<128x256xbf16>
    %cst_16 = arith.constant dense<0.000000e+00> : vector<32x256xf32>
    %24 = tpu.matmul %22, %23, %cst_16 {dimension_numbers = #tpu.dot_dimension_numbers<[1], [0], [0], [1], [0, 0, 1, 1], [], []>} : vector<32x128xbf16>, vector<128x256xbf16>, vector<32x256xf32> -> vector<32x256xf32>
    %c0_17 = arith.constant 0 : index
    %c0_18 = arith.constant 0 : index
    %25 = vector.load %arg8[%c0_17, %c0_18] : memref<1x256xf32, #tpu.memory_space<vmem>>, vector<1x256xf32>
    %26 = vector.broadcast %25 : vector<1x256xf32> to vector<32x256xf32>
    %27 = arith.addf %24, %26 : vector<32x256xf32>
    %cst_19 = arith.constant 0.000000e+00 : f32
    %28 = vector.broadcast %cst_19 : f32 to vector<32x256xf32>
    %29 = arith.maximumf %27, %28 : vector<32x256xf32>
    %30 = arith.truncf %29 : vector<32x256xf32> to vector<32x256xbf16>
    %c0_20 = arith.constant 0 : index
    %c0_21 = arith.constant 0 : index
    %31 = vector.load %arg9[%c0_20, %c0_21] : memref<256x256xbf16, #tpu.memory_space<vmem>>, vector<256x256xbf16>
    %cst_22 = arith.constant dense<0.000000e+00> : vector<32x256xf32>
    %32 = tpu.matmul %30, %31, %cst_22 {dimension_numbers = #tpu.dot_dimension_numbers<[1], [0], [0], [1], [0, 0, 1, 1], [], []>} : vector<32x256xbf16>, vector<256x256xbf16>, vector<32x256xf32> -> vector<32x256xf32>
    %c0_23 = arith.constant 0 : index
    %c0_24 = arith.constant 0 : index
    %33 = vector.load %arg10[%c0_23, %c0_24] : memref<1x256xf32, #tpu.memory_space<vmem>>, vector<1x256xf32>
    %34 = vector.broadcast %33 : vector<1x256xf32> to vector<32x256xf32>
    %35 = arith.addf %32, %34 : vector<32x256xf32>
    %cst_25 = arith.constant 0.000000e+00 : f32
    %36 = vector.broadcast %cst_25 : f32 to vector<32x256xf32>
    %37 = arith.subf %36, %35 : vector<32x256xf32>
    %38 = math.exp %37 : vector<32x256xf32>
    %cst_26 = arith.constant 1.000000e+00 : f32
    %39 = vector.broadcast %cst_26 : f32 to vector<32x256xf32>
    %40 = arith.addf %39, %38 : vector<32x256xf32>
    %41 = tpu.reciprocal %40 : vector<32x256xf32> -> vector<32x256xf32>
    %42 = arith.truncf %41 : vector<32x256xf32> to vector<32x256xbf16>
    %c0_27 = arith.constant 0 : index
    %c0_28 = arith.constant 0 : index
    %43 = vector.load %arg11[%c0_27, %c0_28] : memref<32x256xbf16, #tpu.memory_space<vmem>>, vector<32x256xbf16>
    tpu.vector_store %arg11[%c0_27, %c0_28], %42 {strides = array<i32>} : memref<32x256xbf16, #tpu.memory_space<vmem>>, vector<32x256xbf16>,
    %c0_29 = arith.constant 0 : index
    %c0_30 = arith.constant 0 : index
    %44 = vector.load %arg12[%c0_29, %c0_30] : memref<32x256xf32, #tpu.memory_space<vmem>>, vector<32x256xf32>
    tpu.vector_store %arg12[%c0_29, %c0_30], %13 {strides = array<i32>} : memref<32x256xf32, #tpu.memory_space<vmem>>, vector<32x256xf32>,
    return
  }
  func.func @transform_0(%arg0: i32) -> (i32, i32) {
    %c0_i32 = arith.constant 0 : i32
    %c0_i32_0 = arith.constant 0 : i32
    return %arg0, %c0_i32 : i32, i32
  }
  func.func @transform_1(%arg0: i32) -> (i32, i32) {
    %c0_i32 = arith.constant 0 : i32
    %c0_i32_0 = arith.constant 0 : i32
    return %arg0, %c0_i32 : i32, i32
  }
  func.func @transform_2(%arg0: i32) -> (i32, i32) {
    %c0_i32 = arith.constant 0 : i32
    %c0_i32_0 = arith.constant 0 : i32
    %c0_i32_1 = arith.constant 0 : i32
    return %c0_i32, %c0_i32_0 : i32, i32
  }
  func.func @transform_3(%arg0: i32) -> (i32, i32) {
    %c0_i32 = arith.constant 0 : i32
    %c0_i32_0 = arith.constant 0 : i32
    %c0_i32_1 = arith.constant 0 : i32
    return %c0_i32, %c0_i32_0 : i32, i32
  }
  func.func @transform_4(%arg0: i32) -> (i32, i32) {
    %c0_i32 = arith.constant 0 : i32
    %c0_i32_0 = arith.constant 0 : i32
    %c0_i32_1 = arith.constant 0 : i32
    return %c0_i32, %c0_i32_0 : i32, i32
  }
  func.func @transform_5(%arg0: i32) -> (i32, i32) {
    %c0_i32 = arith.constant 0 : i32
    %c0_i32_0 = arith.constant 0 : i32
    %c0_i32_1 = arith.constant 0 : i32
    return %c0_i32, %c0_i32_0 : i32, i32
  }
  func.func @transform_6(%arg0: i32) -> (i32, i32) {
    %c0_i32 = arith.constant 0 : i32
    %c0_i32_0 = arith.constant 0 : i32
    %c0_i32_1 = arith.constant 0 : i32
    return %c0_i32, %c0_i32_0 : i32, i32
  }
  func.func @transform_7(%arg0: i32) -> (i32, i32) {
    %c0_i32 = arith.constant 0 : i32
    %c0_i32_0 = arith.constant 0 : i32
    %c0_i32_1 = arith.constant 0 : i32
    return %c0_i32, %c0_i32_0 : i32, i32
  }
  func.func @transform_8(%arg0: i32) -> (i32, i32) {
    %c0_i32 = arith.constant 0 : i32
    %c0_i32_0 = arith.constant 0 : i32
    %c0_i32_1 = arith.constant 0 : i32
    return %c0_i32, %c0_i32_0 : i32, i32
  }
  func.func @transform_9(%arg0: i32) -> (i32, i32) {
    %c0_i32 = arith.constant 0 : i32
    %c0_i32_0 = arith.constant 0 : i32
    %c0_i32_1 = arith.constant 0 : i32
    return %c0_i32, %c0_i32_0 : i32, i32
  }
  func.func @transform_10(%arg0: i32) -> (i32, i32) {
    %c0_i32 = arith.constant 0 : i32
    %c0_i32_0 = arith.constant 0 : i32
    return %arg0, %c0_i32 : i32, i32
  }
  func.func @transform_11(%arg0: i32) -> (i32, i32) {
    %c0_i32 = arith.constant 0 : i32
    %c0_i32_0 = arith.constant 0 : i32
    return %arg0, %c0_i32 : i32, i32
  }
}

</mosaic_0001>

<llo_original>
// kernel: tpu_custom_call.1
$region0: #{tpu_custom_call.1}
  #allocation0 [shape = 'u32[]', space=smem, size = 0x4, offset = 0x4, fixed_abs, tag = 'smem constant byte address 0x4 - core index']
  #allocation1 [shape = 'u32[72,128]{1,0:T(1,128)}', space=vmem, size = 0x9000, scoped, tag = 'internal scratch']
  %s0 = inlined_call_operand.hbm [shape: bf16[64,256], index: 0, kind: input, shape index: {}]
  %s1 = inlined_call_operand.hbm [shape: f32[64,128], index: 1, kind: input, shape index: {}]
  %s2 = inlined_call_operand.hbm [shape: bf16[256,256], index: 2, kind: input, shape index: {}]
  %s3 = inlined_call_operand.vmem [shape: f32[1,256], index: 3, kind: input, shape index: {}]
  %s4 = inlined_call_operand.hbm [shape: bf16[256,256], index: 4, kind: input, shape index: {}]
  %s5 = inlined_call_operand.vmem [shape: f32[1,256], index: 5, kind: input, shape index: {}]
  %s6 = inlined_call_operand.hbm [shape: bf16[128,256], index: 6, kind: input, shape index: {}]
  %s7 = inlined_call_operand.vmem [shape: f32[1,256], index: 7, kind: input, shape index: {}]
  %s8 = inlined_call_operand.hbm [shape: bf16[256,256], index: 8, kind: input, shape index: {}]
  %s9 = inlined_call_operand.vmem [shape: f32[1,256], index: 9, kind: input, shape index: {}]
  %s10 = inlined_call_operand.hbm [shape: bf16[64,256], index: 10, kind: output, shape index: {0}]
  %s11 = inlined_call_operand.hbm [shape: f32[64,256], index: 11, kind: output, shape index: {1}]
  %12 = xla_tuple %s10, %s11
  %s13 = sld [smem:[#allocation0]]
  $region105: #{tpu_custom_call.1} parent=0
    _
  %s15 = ssub.s32 1, %s13
  %s16 = scalar_select 0, %s15, %s13
  $region1: #{tpu_custom_call.1} parent=0
    #allocation2 [shape = 'u8[32768]{0}', space=vmem, size = 0x8000, scoped, tag = 'input window, operand 0']
    #allocation3 [shape = 's32[2]{0}', space=sflag, size = 0x8, scoped, tag = 'scoped memory for tpu_custom_call.1']
    #allocation4 [shape = 's32[2]{0}', space=sflag, size = 0x8, scoped, tag = 'scoped memory for tpu_custom_call.1']
    #allocation5 [shape = 'u8[32768]{0}', space=vmem, size = 0x8000, scoped, tag = 'input window, operand 1']
    #allocation6 [shape = 's32[2]{0}', space=sflag, size = 0x8, scoped, tag = 'scoped memory for tpu_custom_call.1']
    #allocation7 [shape = 'u8[131072]{0}', space=vmem, size = 0x20000, scoped, tag = 'input window, operand 2, single buffered']
    #allocation8 [shape = 'u8[131072]{0}', space=vmem, size = 0x20000, scoped, tag = 'input window, operand 4, single buffered']
    #allocation9 [shape = 's32[1]{0}', space=sflag, size = 0x4, scoped, tag = 'scoped memory for tpu_custom_call.1']
    #allocation10 [shape = 'u8[65536]{0}', space=vmem, size = 0x10000, scoped, tag = 'input window, operand 6, single buffered']
    #allocation11 [shape = 'u8[131072]{0}', space=vmem, size = 0x20000, scoped, tag = 'input window, operand 8, single buffered']
    #allocation12 [shape = 's32[1]{0}', space=sflag, size = 0x4, scoped, tag = 'scoped memory for tpu_custom_call.1']
    #allocation13 [shape = 'u8[32768]{0}', space=vmem, size = 0x8000, scoped, tag = 'output window, operand 0']
    #allocation14 [shape = 'u8[65536]{0}', space=vmem, size = 0x10000, scoped, tag = 'output window, operand 1']
    #allocation15 [shape = 's32[2]{0}', space=sflag, size = 0x8, scoped, tag = 'scoped memory for tpu_custom_call.1']
    %17 = vsyncpa [#allocation3], 0
    %s18 = scalar_lea.sflag [#allocation3], 1
    %19 = vsyncpa %s18, 0
    %20 = vsyncpa [#allocation6], 0
    %s21 = scalar_lea.sflag [#allocation6], 1
    %22 = vsyncpa %s21, 0
    %23 = vsyncpa [#allocation9], 0
    %24 = vsyncpa [#allocation12], 0
    %25 = vsyncpa [#allocation4], 0
    %s26 = scalar_lea.sflag [#allocation4], 1
    %27 = vsyncpa %s26, 0
    %28 = vsyncpa [#allocation15], 0
    %s29 = scalar_lea.sflag [#allocation15], 1
    %30 = vsyncpa %s29, 0
    loop: start=0, step=1, limit=4
    $region2: #{tpu_custom_call.1} parent=1 // loop_pre_header
      _
    $region3: #{tpu_custom_call.1} parent=1 // loop_header
      %s32 = sphi 0, %s36
      %p33 = scmp.ge.s32.totalorder %s32, 4
      %s42 = sphi 0, %s44
      %s45 = sphi 0, %s42
      %s46 = sphi 0, %s45
      %s62 = sphi 0, %s46
      %s68 = sphi 0, %s70
      %s71 = sphi 0, %s68
      %s72 = sphi 0, %s71
      %s88 = sphi 0, %s72
      %s92 = sphi 0, %s92
      %s94 = sphi 0, %s92
      %s95 = sphi 0, %s94
      %s109 = sphi 0, %s95
      %s113 = sphi 0, %s113
      %s115 = sphi 0, %s113
      %s116 = sphi 0, %s115
      %s130 = sphi 0, %s116
      %s134 = sphi 0, %s134
      %s136 = sphi 0, %s134
      %s137 = sphi 0, %s136
      %s151 = sphi 0, %s137
      %s155 = sphi 0, %s155
      %s157 = sphi 0, %s155
      %s158 = sphi 0, %s157
      %s172 = sphi 0, %s158
      %s176 = sphi 0, %s176
      %s178 = sphi 0, %s176
      %s179 = sphi 0, %s178
      %s193 = sphi 0, %s179
      %s197 = sphi 0, %s197
      %s199 = sphi 0, %s197
      %s200 = sphi 0, %s199
      %s214 = sphi 0, %s200
      %s218 = sphi 0, %s218
      %s220 = sphi 0, %s218
      %s221 = sphi 0, %s220
      %s235 = sphi 0, %s221
      %s239 = sphi 0, %s239
      %s241 = sphi 0, %s239
      %s242 = sphi 0, %s241
      %s256 = sphi 0, %s242
      %s262 = sphi 0, %s264
      %s265 = sphi 0, %s262
      %s266 = sphi 0, %s265
      %s282 = sphi 0, %s266
      %s288 = sphi 0, %s290
      %s291 = sphi 0, %s288
      %s292 = sphi 0, %s291
      %s308 = sphi 0, %s292
    $region4: #{tpu_custom_call.1} parent=1 // loop_header_branch
      %35 = sbr.rel (%p33) target = $region8
    $region5: #{tpu_custom_call.1} parent=1 // loop_body
      %s37 = ssub.s32 %s32, 1
      %s38 = ssub.s32 %s32, 2
      %s39 = sadd.s32 %s32, 1
      %s40 = ssub.s32 %s32, %s39
      %p41 = scmp.eq.s32.totalorder %s40, 0
      %s43 = sadd.s32 %s42, 1
      %s44 = scalar_select %p41, %s42, %s43
      %p47 = pneg %p41
      %p48 = scmp.eq.s32.totalorder %s32, 1
      %p49 = por %p47, %p48
      %p50 = scmp.ne.s32.totalorder %s42, %s45
      %p51 = scmp.eq.s32.totalorder %s32, 0
      %p52 = por %p50, %p51
      %p53 = scmp.ne.s32.totalorder %s42, %s45
      %p54 = scmp.eq.s32.totalorder %s37, 1
      %p55 = por %p53, %p54
      %p56 = scmp.ne.s32.totalorder %s45, %s46
      %p57 = scmp.eq.s32.totalorder %s37, 0
      %p58 = por %p56, %p57
      %p59 = scmp.ne.s32.totalorder %s45, %s46
      %p60 = scmp.eq.s32.totalorder %s38, 1
      %p61 = por %p59, %p60
      %p63 = scmp.ne.s32.totalorder %s46, %s62
      %p64 = scmp.eq.s32.totalorder %s38, 0
      %p65 = por %p63, %p64
      %s66 = ssub.s32 %s32, %s39
      %p67 = scmp.eq.s32.totalorder %s66, 0
      %s69 = sadd.s32 %s68, 1
      %s70 = scalar_select %p67, %s68, %s69
      %p73 = pneg %p67
      %p74 = scmp.eq.s32.totalorder %s32, 1
      %p75 = por %p73, %p74
      %p76 = scmp.ne.s32.totalorder %s68, %s71
      %p77 = scmp.eq.s32.totalorder %s32, 0
      %p78 = por %p76, %p77
      %p79 = scmp.ne.s32.totalorder %s68, %s71
      %p80 = scmp.eq.s32.totalorder %s37, 1
      %p81 = por %p79, %p80
      %p82 = scmp.ne.s32.totalorder %s71, %s72
      %p83 = scmp.eq.s32.totalorder %s37, 0
      %p84 = por %p82, %p83
      %p85 = scmp.ne.s32.totalorder %s71, %s72
      %p86 = scmp.eq.s32.totalorder %s38, 1
      %p87 = por %p85, %p86
      %p89 = scmp.ne.s32.totalorder %s72, %s88
      %p90 = scmp.eq.s32.totalorder %s38, 0
      %p91 = por %p89, %p90
      %s93 = sadd.s32 %s92, 1
      %p96 = scmp.eq.s32.totalorder %s32, 1
      %p97 = scmp.ne.s32.totalorder %s92, %s94
      %p98 = scmp.eq.s32.totalorder %s32, 0
      %p99 = por %p97, %p98
      %p100 = scmp.ne.s32.totalorder %s92, %s94
      %p101 = scmp.eq.s32.totalorder %s37, 1
      %p102 = por %p100, %p101
      %p103 = scmp.ne.s32.totalorder %s94, %s95
      %p104 = scmp.eq.s32.totalorder %s37, 0
      %p105 = por %p103, %p104
      %p106 = scmp.ne.s32.totalorder %s94, %s95
      %p107 = scmp.eq.s32.totalorder %s38, 1
      %p108 = por %p106, %p107
      %p110 = scmp.ne.s32.totalorder %s95, %s109
      %p111 = scmp.eq.s32.totalorder %s38, 0
      %p112 = por %p110, %p111
      %s114 = sadd.s32 %s113, 1
      %p117 = scmp.eq.s32.totalorder %s32, 1
      %p118 = scmp.ne.s32.totalorder %s113, %s115
      %p119 = scmp.eq.s32.totalorder %s32, 0
      %p120 = por %p118, %p119
      %p121 = scmp.ne.s32.totalorder %s113, %s115
      %p122 = scmp.eq.s32.totalorder %s37, 1
      %p123 = por %p121, %p122
      %p124 = scmp.ne.s32.totalorder %s115, %s116
      %p125 = scmp.eq.s32.totalorder %s37, 0
      %p126 = por %p124, %p125
      %p127 = scmp.ne.s32.totalorder %s115, %s116
      %p128 = scmp.eq.s32.totalorder %s38, 1
      %p129 = por %p127, %p128
      %p131 = scmp.ne.s32.totalorder %s116, %s130
      %p132 = scmp.eq.s32.totalorder %s38, 0
      %p133 = por %p131, %p132
      %s135 = sadd.s32 %s134, 1
      %p138 = scmp.eq.s32.totalorder %s32, 1
      %p139 = scmp.ne.s32.totalorder %s134, %s136
      %p140 = scmp.eq.s32.totalorder %s32, 0
      %p141 = por %p139, %p140
      %p142 = scmp.ne.s32.totalorder %s134, %s136
      %p143 = scmp.eq.s32.totalorder %s37, 1
      %p144 = por %p142, %p143
      %p145 = scmp.ne.s32.totalorder %s136, %s137
      %p146 = scmp.eq.s32.totalorder %s37, 0
      %p147 = por %p145, %p146
      %p148 = scmp.ne.s32.totalorder %s136, %s137
      %p149 = scmp.eq.s32.totalorder %s38, 1
      %p150 = por %p148, %p149
      %p152 = scmp.ne.s32.totalorder %s137, %s151
      %p153 = scmp.eq.s32.totalorder %s38, 0
      %p154 = por %p152, %p153
      %s156 = sadd.s32 %s155, 1
      %p159 = scmp.eq.s32.totalorder %s32, 1
      %p160 = scmp.ne.s32.totalorder %s155, %s157
      %p161 = scmp.eq.s32.totalorder %s32, 0
      %p162 = por %p160, %p161
      %p163 = scmp.ne.s32.totalorder %s155, %s157
      %p164 = scmp.eq.s32.totalorder %s37, 1
      %p165 = por %p163, %p164
      %p166 = scmp.ne.s32.totalorder %s157, %s158
      %p167 = scmp.eq.s32.totalorder %s37, 0
      %p168 = por %p166, %p167
      %p169 = scmp.ne.s32.totalorder %s157, %s158
      %p170 = scmp.eq.s32.totalorder %s38, 1
      %p171 = por %p169, %p170
      %p173 = scmp.ne.s32.totalorder %s158, %s172
      %p174 = scmp.eq.s32.totalorder %s38, 0
      %p175 = por %p173, %p174
      %s177 = sadd.s32 %s176, 1
      %p180 = scmp.eq.s32.totalorder %s32, 1
      %p181 = scmp.ne.s32.totalorder %s176, %s178
      %p182 = scmp.eq.s32.totalorder %s32, 0
      %p183 = por %p181, %p182
      %p184 = scmp.ne.s32.totalorder %s176, %s178
      %p185 = scmp.eq.s32.totalorder %s37, 1
      %p186 = por %p184, %p185
      %p187 = scmp.ne.s32.totalorder %s178, %s179
      %p188 = scmp.eq.s32.totalorder %s37, 0
      %p189 = por %p187, %p188
      %p190 = scmp.ne.s32.totalorder %s178, %s179
      %p191 = scmp.eq.s32.totalorder %s38, 1
      %p192 = por %p190, %p191
      %p194 = scmp.ne.s32.totalorder %s179, %s193
      %p195 = scmp.eq.s32.totalorder %s38, 0
      %p196 = por %p194, %p195
      %s198 = sadd.s32 %s197, 1
      %p201 = scmp.eq.s32.totalorder %s32, 1
      %p202 = scmp.ne.s32.totalorder %s197, %s199
      %p203 = scmp.eq.s32.totalorder %s32, 0
      %p204 = por %p202, %p203
      %p205 = scmp.ne.s32.totalorder %s197, %s199
      %p206 = scmp.eq.s32.totalorder %s37, 1
      %p207 = por %p205, %p206
      %p208 = scmp.ne.s32.totalorder %s199, %s200
      %p209 = scmp.eq.s32.totalorder %s37, 0
      %p210 = por %p208, %p209
      %p211 = scmp.ne.s32.totalorder %s199, %s200
      %p212 = scmp.eq.s32.totalorder %s38, 1
      %p213 = por %p211, %p212
      %p215 = scmp.ne.s32.totalorder %s200, %s214
      %p216 = scmp.eq.s32.totalorder %s38, 0
      %p217 = por %p215, %p216
      %s219 = sadd.s32 %s218, 1
      %p222 = scmp.eq.s32.totalorder %s32, 1
      %p223 = scmp.ne.s32.totalorder %s218, %s220
      %p224 = scmp.eq.s32.totalorder %s32, 0
      %p225 = por %p223, %p224
      %p226 = scmp.ne.s32.totalorder %s218, %s220
      %p227 = scmp.eq.s32.totalorder %s37, 1
      %p228 = por %p226, %p227
      %p229 = scmp.ne.s32.totalorder %s220, %s221
      %p230 = scmp.eq.s32.totalorder %s37, 0
      %p231 = por %p229, %p230
      %p232 = scmp.ne.s32.totalorder %s220, %s221
      %p233 = scmp.eq.s32.totalorder %s38, 1
      %p234 = por %p232, %p233
      %p236 = scmp.ne.s32.totalorder %s221, %s235
      %p237 = scmp.eq.s32.totalorder %s38, 0
      %p238 = por %p236, %p237
      %s240 = sadd.s32 %s239, 1
      %p243 = scmp.eq.s32.totalorder %s32, 1
      %p244 = scmp.ne.s32.totalorder %s239, %s241
      %p245 = scmp.eq.s32.totalorder %s32, 0
      %p246 = por %p244, %p245
      %p247 = scmp.ne.s32.totalorder %s239, %s241
      %p248 = scmp.eq.s32.totalorder %s37, 1
      %p249 = por %p247, %p248
      %p250 = scmp.ne.s32.totalorder %s241, %s242
      %p251 = scmp.eq.s32.totalorder %s37, 0
      %p252 = por %p250, %p251
      %p253 = scmp.ne.s32.totalorder %s241, %s242
      %p254 = scmp.eq.s32.totalorder %s38, 1
      %p255 = por %p253, %p254
      %p257 = scmp.ne.s32.totalorder %s242, %s256
      %p258 = scmp.eq.s32.totalorder %s38, 0
      %p259 = por %p257, %p258
      %s260 = ssub.s32 %s32, %s39
      %p261 = scmp.eq.s32.totalorder %s260, 0
      %s263 = sadd.s32 %s262, 1
      %s264 = scalar_select %p261, %s262, %s263
      %p267 = pneg %p261
      %p268 = scmp.eq.s32.totalorder %s32, 1
      %p269 = por %p267, %p268
      %p270 = scmp.ne.s32.totalorder %s262, %s265
      %p271 = scmp.eq.s32.totalorder %s32, 0
      %p272 = por %p270, %p271
      %p273 = scmp.ne.s32.totalorder %s262, %s265
      %p274 = scmp.eq.s32.totalorder %s37, 1
      %p275 = por %p273, %p274
      %p276 = scmp.ne.s32.totalorder %s265, %s266
      %p277 = scmp.eq.s32.totalorder %s37, 0
      %p278 = por %p276, %p277
      %p279 = scmp.ne.s32.totalorder %s265, %s266
      %p280 = scmp.eq.s32.totalorder %s38, 1
      %p281 = por %p279, %p280
      %p283 = scmp.ne.s32.totalorder %s266, %s282
      %p284 = scmp.eq.s32.totalorder %s38, 0
      %p285 = por %p283, %p284
      %s286 = ssub.s32 %s32, %s39
      %p287 = scmp.eq.s32.totalorder %s286, 0
      %s289 = sadd.s32 %s288, 1
      %s290 = scalar_select %p287, %s288, %s289
      %p293 = pneg %p287
      %p294 = scmp.eq.s32.totalorder %s32, 1
      %p295 = por %p293, %p294
      %p296 = scmp.ne.s32.totalorder %s288, %s291
      %p297 = scmp.eq.s32.totalorder %s32, 0
      %p298 = por %p296, %p297
      %p299 = scmp.ne.s32.totalorder %s288, %s291
      %p300 = scmp.eq.s32.totalorder %s37, 1
      %p301 = por %p299, %p300
      %p302 = scmp.ne.s32.totalorder %s291, %s292
      %p303 = scmp.eq.s32.totalorder %s37, 0
      %p304 = por %p302, %p303
      %p305 = scmp.ne.s32.totalorder %s291, %s292
      %p306 = scmp.eq.s32.totalorder %s38, 1
      %p307 = por %p305, %p306
      %p309 = scmp.ne.s32.totalorder %s292, %s308
      %p310 = scmp.eq.s32.totalorder %s38, 0
      %p311 = por %p309, %p310
      %p312 = scmp.le.s32.totalorder 1, %s32
      %p313 = scmp.lt.s32.totalorder %s32, 3
      %p314 = pnand %p312, %p313
      %p315 = pneg %p314
      // Predicated region
      $region9: #{tpu_custom_call.1} parent=5 // pred_check
        _
      $region10: #{tpu_custom_call.1} parent=5 // pred_check_branch
        %317 = sbr.rel (%p314) target = $region12
      $region11: #{tpu_custom_call.1} parent=5 // pred_region
        %s318 = ssub.s32 %s32, 1
        // Predicated region
        $region13: #{tpu_custom_call.1} parent=11 // pred_check
          %p319 = pneg %p105
        $region14: #{tpu_custom_call.1} parent=11 // pred_check_branch
          %321 = sbr.rel (%p319) target = $region16
        $region15: #{tpu_custom_call.1} parent=11 // pred_region
          %323 = vsyncadd [#allocation6], 0
          %s324 = sshll.u32 %s2, 4
          %s325 = int_to_ptr.hbm [resolvable:$true] %s324
          %s326 = sshll.u32 [#allocation7], 4
          %s327 = int_to_ptr.vmem [resolvable:$true] %s326
          %332 = dma.hbm_to_vmem [thread:$0]  %s325, 4096, %s327, [#allocation6], 128, 128, 8
        $region16: #{tpu_custom_call.1} parent=11 // pred_fallthru
          _
        // Predicated region
        $region17: #{tpu_custom_call.1} parent=11 // pred_check
          %p333 = pneg %p126
        $region18: #{tpu_custom_call.1} parent=11 // pred_check_branch
          %335 = sbr.rel (%p333) target = $region20
        $region19: #{tpu_custom_call.1} parent=11 // pred_region
          _
        $region20: #{tpu_custom_call.1} parent=11 // pred_fallthru
          _
        // Predicated region
        $region21: #{tpu_custom_call.1} parent=11 // pred_check
          %p336 = pneg %p147
        $region22: #{tpu_custom_call.1} parent=11 // pred_check_branch
          %338 = sbr.rel (%p336) target = $region24
        $region23: #{tpu_custom_call.1} parent=11 // pred_region
          %340 = vsyncadd [#allocation9], 0
          %s341 = sshll.u32 %s4, 4
          %s342 = int_to_ptr.hbm [resolvable:$true] %s341
          %s343 = sshll.u32 [#allocation8], 4
          %s344 = int_to_ptr.vmem [resolvable:$true] %s343
          %349 = dma.hbm_to_vmem [thread:$0]  %s342, 4096, %s344, [#allocation9], 128, 128, 8
        $region24: #{tpu_custom_call.1} parent=11 // pred_fallthru
          _
        // Predicated region
        $region25: #{tpu_custom_call.1} parent=11 // pred_check
          %p350 = pneg %p168
        $region26: #{tpu_custom_call.1} parent=11 // pred_check_branch
          %352 = sbr.rel (%p350) target = $region28
        $region27: #{tpu_custom_call.1} parent=11 // pred_region
          _
        $region28: #{tpu_custom_call.1} parent=11 // pred_fallthru
          _
        // Predicated region
        $region29: #{tpu_custom_call.1} parent=11 // pred_check
          %p353 = pneg %p189
        $region30: #{tpu_custom_call.1} parent=11 // pred_check_branch
          %355 = sbr.rel (%p353) target = $region32
        $region31: #{tpu_custom_call.1} parent=11 // pred_region
          %357 = vsyncadd [#allocation9], 0
          %s358 = sshll.u32 %s6, 4
          %s359 = int_to_ptr.hbm [resolvable:$true] %s358
          %s360 = sshll.u32 [#allocation10], 4
          %s361 = int_to_ptr.vmem [resolvable:$true] %s360
          %366 = dma.hbm_to_vmem [thread:$0]  %s359, 2048, %s361, [#allocation9], 128, 128, 8
        $region32: #{tpu_custom_call.1} parent=11 // pred_fallthru
          _
        // Predicated region
        $region33: #{tpu_custom_call.1} parent=11 // pred_check
          %p367 = pneg %p210
        $region34: #{tpu_custom_call.1} parent=11 // pred_check_branch
          %369 = sbr.rel (%p367) target = $region36
        $region35: #{tpu_custom_call.1} parent=11 // pred_region
          _
        $region36: #{tpu_custom_call.1} parent=11 // pred_fallthru
          _
        // Predicated region
        $region37: #{tpu_custom_call.1} parent=11 // pred_check
          %p370 = pneg %p231
        $region38: #{tpu_custom_call.1} parent=11 // pred_check_branch
          %372 = sbr.rel (%p370) target = $region40
        $region39: #{tpu_custom_call.1} parent=11 // pred_region
          %374 = vsyncadd [#allocation12], 0
          %s375 = sshll.u32 %s8, 4
          %s376 = int_to_ptr.hbm [resolvable:$true] %s375
          %s377 = sshll.u32 [#allocation11], 4
          %s378 = int_to_ptr.vmem [resolvable:$true] %s377
          %383 = dma.hbm_to_vmem [thread:$0]  %s376, 4096, %s378, [#allocation12], 128, 128, 8
        $region40: #{tpu_custom_call.1} parent=11 // pred_fallthru
          _
        // Predicated region
        $region41: #{tpu_custom_call.1} parent=11 // pred_check
          %p384 = pneg %p252
        $region42: #{tpu_custom_call.1} parent=11 // pred_check_branch
          %386 = sbr.rel (%p384) target = $region44
        $region43: #{tpu_custom_call.1} parent=11 // pred_region
          _
        $region44: #{tpu_custom_call.1} parent=11 // pred_fallthru
          _
      $region12: #{tpu_custom_call.1} parent=5 // pred_fallthru
        _
      %p387 = scmp.lt.s32.totalorder %s32, 2
      // Predicated region
      $region45: #{tpu_custom_call.1} parent=5 // pred_check
        %p388 = pneg %p387
      $region46: #{tpu_custom_call.1} parent=5 // pred_check_branch
        %390 = sbr.rel (%p388) target = $region48
      $region47: #{tpu_custom_call.1} parent=5 // pred_region
        // Predicated region
        $region49: #{tpu_custom_call.1} parent=47 // pred_check
          %p391 = pneg %p52
        $region50: #{tpu_custom_call.1} parent=47 // pred_check_branch
          %393 = sbr.rel (%p391) target = $region52
        $region51: #{tpu_custom_call.1} parent=47 // pred_region
          %s394 = sand.u32 %s42, 1
          %s395 = scalar_lea.sflag [#allocation3], %s394
          %s396 = sand.u32 %s42, 1
          %s397 = smul.addr %s396, 32
          %s398 = scalar_lea.vmem [#allocation2], %s397
          %s399 = smul.u32 4, %s32
          %401 = vsyncadd %s395, 0
          %s402 = smul.addr %s399, 2
          %s403 = smul.addr %s402, 4
          %s404 = scalar_lea.hbm %s0, %s403
          %s405 = sshll.u32 %s404, 4
          %s406 = int_to_ptr.hbm [resolvable:$true] %s405
          %s407 = sshll.u32 %s398, 4
          %s408 = int_to_ptr.vmem [resolvable:$true] %s407
          %413 = dma.hbm_to_vmem [thread:$0]  %s406, 512, %s408, %s395, 128, 128, 8
        $region52: #{tpu_custom_call.1} parent=47 // pred_fallthru
          _
        // Predicated region
        $region53: #{tpu_custom_call.1} parent=47 // pred_check
          %p414 = pneg %p78
        $region54: #{tpu_custom_call.1} parent=47 // pred_check_branch
          %416 = sbr.rel (%p414) target = $region56
        $region55: #{tpu_custom_call.1} parent=47 // pred_region
          %s417 = sand.u32 %s32, 1
          %s418 = scalar_lea.sflag [#allocation6], %s417
          %s419 = sand.u32 %s68, 1
          %s420 = smul.addr %s419, 32
          %s421 = scalar_lea.vmem [#allocation5], %s420
          %s422 = smul.u32 4, %s32
          %424 = vsyncadd %s418, 0
          %s425 = smul.addr %s422, 8
          %s426 = scalar_lea.hbm %s1, %s425
          %s427 = sshll.u32 %s426, 4
          %s428 = int_to_ptr.hbm [resolvable:$true] %s427
          %s429 = sshll.u32 %s421, 4
          %s430 = int_to_ptr.vmem [resolvable:$true] %s429
          %435 = dma.hbm_to_vmem [thread:$0]  %s428, 512, %s430, %s418, 128, 128, 8
        $region56: #{tpu_custom_call.1} parent=47 // pred_fallthru
          _
      $region48: #{tpu_custom_call.1} parent=5 // pred_fallthru
        _
      %p436 = scmp.le.s32.totalorder 1, %s32
      %p437 = scmp.lt.s32.totalorder %s32, 3
      %p438 = pnand %p436, %p437
      %p439 = pneg %p438
      // Predicated region
      $region57: #{tpu_custom_call.1} parent=5 // pred_check
        _
      $region58: #{tpu_custom_call.1} parent=5 // pred_check_branch
        %441 = sbr.rel (%p438) target = $region60
      $region59: #{tpu_custom_call.1} parent=5 // pred_region
        %s442 = ssub.s32 %s32, 1
        %s443 = sand.u32 %s45, 1
        %s444 = scalar_lea.sflag [#allocation3], %s443
        %s445 = sand.u32 %s45, 1
        %s446 = smul.addr %s445, 32
        %s447 = scalar_lea.vmem [#allocation2], %s446
        // Predicated region
        $region61: #{tpu_custom_call.1} parent=59 // pred_check
          %p448 = pneg %p58
        $region62: #{tpu_custom_call.1} parent=59 // pred_check_branch
          %450 = sbr.rel (%p448) target = $region64
        $region63: #{tpu_custom_call.1} parent=59 // pred_region
          %452 = dma.done %s444, 512
        $region64: #{tpu_custom_call.1} parent=59 // pred_fallthru
          _
        %s453 = sand.u32 %s37, 1
        %s454 = scalar_lea.sflag [#allocation6], %s453
        %s455 = sand.u32 %s71, 1
        %s456 = smul.addr %s455, 32
        %s457 = scalar_lea.vmem [#allocation5], %s456
        // Predicated region
        $region65: #{tpu_custom_call.1} parent=59 // pred_check
          %p458 = pneg %p84
        $region66: #{tpu_custom_call.1} parent=59 // pred_check_branch
          %460 = sbr.rel (%p458) target = $region68
        $region67: #{tpu_custom_call.1} parent=59 // pred_region
          %462 = dma.done %s454, 512
        $region68: #{tpu_custom_call.1} parent=59 // pred_fallthru
          _
        // Predicated region
        $region69: #{tpu_custom_call.1} parent=59 // pred_check
          %p463 = pneg %p105
        $region70: #{tpu_custom_call.1} parent=59 // pred_check_branch
          %465 = sbr.rel (%p463) target = $region72
        $region71: #{tpu_custom_call.1} parent=59 // pred_region
          %467 = dma.done [#allocation6], 4096
        $region72: #{tpu_custom_call.1} parent=59 // pred_fallthru
          _
        // Predicated region
        $region73: #{tpu_custom_call.1} parent=59 // pred_check
          %p468 = pneg %p147
        $region74: #{tpu_custom_call.1} parent=59 // pred_check_branch
          %470 = sbr.rel (%p468) target = $region76
        $region75: #{tpu_custom_call.1} parent=59 // pred_region
          %472 = dma.done [#allocation9], 4096
        $region76: #{tpu_custom_call.1} parent=59 // pred_fallthru
          _
        // Predicated region
        $region77: #{tpu_custom_call.1} parent=59 // pred_check
          %p473 = pneg %p189
        $region78: #{tpu_custom_call.1} parent=59 // pred_check_branch
          %475 = sbr.rel (%p473) target = $region80
        $region79: #{tpu_custom_call.1} parent=59 // pred_region
          %477 = dma.done [#allocation9], 2048
        $region80: #{tpu_custom_call.1} parent=59 // pred_fallthru
          _
        // Predicated region
        $region81: #{tpu_custom_call.1} parent=59 // pred_check
          %p478 = pneg %p231
        $region82: #{tpu_custom_call.1} parent=59 // pred_check_branch
          %480 = sbr.rel (%p478) target = $region84
        $region83: #{tpu_custom_call.1} parent=59 // pred_region
          %482 = dma.done [#allocation12], 4096
        $region84: #{tpu_custom_call.1} parent=59 // pred_fallthru
          _
        %s483 = sand.u32 %s45, 1
        %s484 = scalar_lea.sflag [#allocation3], %s483
        %s485 = sand.u32 %s45, 1
        %s486 = smul.addr %s485, 32
        %s487 = scalar_lea.vmem [#allocation2], %s486
        %p488 = pneg %p58
        %p489 = pneg %p55
        %s490 = sand.u32 %s37, 1
        %s491 = scalar_lea.sflag [#allocation6], %s490
        %s492 = sand.u32 %s71, 1
        %s493 = smul.addr %s492, 32
        %s494 = scalar_lea.vmem [#allocation5], %s493
        %p495 = pneg %p84
        %p496 = pneg %p81
        %p497 = pneg %p105
        %p498 = pneg %p102
        %p499 = pneg %p126
        %p500 = pneg %p123
        %p501 = pneg %p147
        %p502 = pneg %p144
        %p503 = pneg %p168
        %p504 = pneg %p165
        %p505 = pneg %p189
        %p506 = pneg %p186
        %p507 = pneg %p210
        %p508 = pneg %p207
        %p509 = pneg %p231
        %p510 = pneg %p228
        %p511 = pneg %p252
        %p512 = pneg %p249
        %p513 = pneg %p278
        %p514 = pneg %p275
        %s515 = sand.u32 %s265, 1
        %s516 = scalar_lea.sflag [#allocation4], %s515
        %s517 = sand.u32 %s265, 1
        %s518 = smul.addr %s517, 32
        %s519 = scalar_lea.vmem [#allocation13], %s518
        %p520 = pneg %p304
        %p521 = pneg %p301
        %s522 = sand.u32 %s291, 1
        %s523 = scalar_lea.sflag [#allocation15], %s522
        %s524 = sand.u32 %s291, 1
        %s525 = smul.addr %s524, 64
        %s526 = scalar_lea.vmem [#allocation14], %s525
        %s527 = smul.u32 4, %s37
        %s528 = smul.u32 4, %s37
        %s529 = smul.u32 4, %s37
        %s530 = smul.u32 4, %s37
        %v531 = vld [vmem:[%s447] sm:$0xff]
        %v532 = vld [vmem:[%s447 + $0x8] sm:$0xff]
        %v533 = vld [vmem:[%s447 + $0x10] sm:$0xff]
        %v534 = vld [vmem:[%s447 + $0x18] sm:$0xff]
        %v535 = vld [vmem:[#allocation7] sm:$0xff]
        %v536 = vld [vmem:[#allocation7 + $0x8] sm:$0xff]
        %v537 = vld [vmem:[#allocation7 + $0x10] sm:$0xff]
        %v538 = vld [vmem:[#allocation7 + $0x18] sm:$0xff]
        %v539 = vld [vmem:[#allocation7 + $0x20] sm:$0xff]
        %v540 = vld [vmem:[#allocation7 + $0x28] sm:$0xff]
        %v541 = vld [vmem:[#allocation7 + $0x30] sm:$0xff]
        %v542 = vld [vmem:[#allocation7 + $0x38] sm:$0xff]
        %v543 = vld [vmem:[#allocation7 + $0x40] sm:$0xff]
        %v544 = vld [vmem:[#allocation7 + $0x48] sm:$0xff]
        %v545 = vld [vmem:[#allocation7 + $0x50] sm:$0xff]
        %v546 = vld [vmem:[#allocation7 + $0x58] sm:$0xff]
        %v547 = vld [vmem:[#allocation7 + $0x60] sm:$0xff]
        %v548 = vld [vmem:[#allocation7 + $0x68] sm:$0xff]
        %v549 = vld [vmem:[#allocation7 + $0x70] sm:$0xff]
        %v550 = vld [vmem:[#allocation7 + $0x78] sm:$0xff]
        %v551 = vld [vmem:[#allocation7 + $0x80] sm:$0xff]
        %v552 = vld [vmem:[#allocation7 + $0x88] sm:$0xff]
        %v553 = vld [vmem:[#allocation7 + $0x90] sm:$0xff]
        %v554 = vld [vmem:[#allocation7 + $0x98] sm:$0xff]
        %v555 = vld [vmem:[#allocation7 + $0xa0] sm:$0xff]
        %v556 = vld [vmem:[#allocation7 + $0xa8] sm:$0xff]
        %v557 = vld [vmem:[#allocation7 + $0xb0] sm:$0xff]
        %v558 = vld [vmem:[#allocation7 + $0xb8] sm:$0xff]
        %v559 = vld [vmem:[#allocation7 + $0xc0] sm:$0xff]
        %v560 = vld [vmem:[#allocation7 + $0xc8] sm:$0xff]
        %v561 = vld [vmem:[#allocation7 + $0xd0] sm:$0xff]
        %v562 = vld [vmem:[#allocation7 + $0xd8] sm:$0xff]
        %v563 = vld [vmem:[#allocation7 + $0xe0] sm:$0xff]
        %v564 = vld [vmem:[#allocation7 + $0xe8] sm:$0xff]
        %v565 = vld [vmem:[#allocation7 + $0xf0] sm:$0xff]
        %v566 = vld [vmem:[#allocation7 + $0xf8] sm:$0xff]
        %v567 = vld [vmem:[%s3] sm:$0x3]
        %v569 = vperm.slane %v567, 0
        %v570 = vperm.slane %v567, 1
        %v577 = vunpack.c.l.b16 %v531
        %v578 = vunpack.c.h.b16 %v531
        %v579 = vunpack.c.l.b16 %v532
        %v580 = vunpack.c.h.b16 %v532
        %v581 = vunpack.c.l.b16 %v533
        %v582 = vunpack.c.h.b16 %v533
        %v583 = vunpack.c.l.b16 %v534
        %v584 = vunpack.c.h.b16 %v534
        %v585 = vpack.c.b16 %v579, %v577
        %v586 = vpack.c.b16 %v580, %v578
        %v587 = vpack.c.b16 %v583, %v581
        %v588 = vpack.c.b16 %v584, %v582
        %v625 = vunpack.c.l.b16 %v535
        %v626 = vunpack.c.h.b16 %v535
        %v627 = vunpack.c.l.b16 %v536
        %v628 = vunpack.c.h.b16 %v536
        %v629 = vunpack.c.l.b16 %v537
        %v630 = vunpack.c.h.b16 %v537
        %v631 = vunpack.c.l.b16 %v538
        %v632 = vunpack.c.h.b16 %v538
        %v633 = vunpack.c.l.b16 %v539
        %v634 = vunpack.c.h.b16 %v539
        %v635 = vunpack.c.l.b16 %v540
        %v636 = vunpack.c.h.b16 %v540
        %v637 = vunpack.c.l.b16 %v541
        %v638 = vunpack.c.h.b16 %v541
        %v639 = vunpack.c.l.b16 %v542
        %v640 = vunpack.c.h.b16 %v542
        %v641 = vunpack.c.l.b16 %v543
        %v642 = vunpack.c.h.b16 %v543
        %v643 = vunpack.c.l.b16 %v544
        %v644 = vunpack.c.h.b16 %v544
        %v645 = vunpack.c.l.b16 %v545
        %v646 = vunpack.c.h.b16 %v545
        %v647 = vunpack.c.l.b16 %v546
        %v648 = vunpack.c.h.b16 %v546
        %v649 = vunpack.c.l.b16 %v547
        %v650 = vunpack.c.h.b16 %v547
        %v651 = vunpack.c.l.b16 %v548
        %v652 = vunpack.c.h.b16 %v548
        %v653 = vunpack.c.l.b16 %v549
        %v654 = vunpack.c.h.b16 %v549
        %v655 = vunpack.c.l.b16 %v550
        %v656 = vunpack.c.h.b16 %v550
        %v657 = vunpack.c.l.b16 %v551
        %v658 = vunpack.c.h.b16 %v551
        %v659 = vunpack.c.l.b16 %v552
        %v660 = vunpack.c.h.b16 %v552
        %v661 = vunpack.c.l.b16 %v553
        %v662 = vunpack.c.h.b16 %v553
        %v663 = vunpack.c.l.b16 %v554
        %v664 = vunpack.c.h.b16 %v554
        %v665 = vunpack.c.l.b16 %v555
        %v666 = vunpack.c.h.b16 %v555
        %v667 = vunpack.c.l.b16 %v556
        %v668 = vunpack.c.h.b16 %v556
        %v669 = vunpack.c.l.b16 %v557
        %v670 = vunpack.c.h.b16 %v557
        %v671 = vunpack.c.l.b16 %v558
        %v672 = vunpack.c.h.b16 %v558
        %v673 = vunpack.c.l.b16 %v559
        %v674 = vunpack.c.h.b16 %v559
        %v675 = vunpack.c.l.b16 %v560
        %v676 = vunpack.c.h.b16 %v560
        %v677 = vunpack.c.l.b16 %v561
        %v678 = vunpack.c.h.b16 %v561
        %v679 = vunpack.c.l.b16 %v562
        %v680 = vunpack.c.h.b16 %v562
        %v681 = vunpack.c.l.b16 %v563
        %v682 = vunpack.c.h.b16 %v563
        %v683 = vunpack.c.l.b16 %v564
        %v684 = vunpack.c.h.b16 %v564
        %v685 = vunpack.c.l.b16 %v565
        %v686 = vunpack.c.h.b16 %v565
        %v687 = vunpack.c.l.b16 %v566
        %v688 = vunpack.c.h.b16 %v566
        %v689 = vpack.c.b16 %v627, %v625
        %v690 = vpack.c.b16 %v628, %v626
        %v691 = vpack.c.b16 %v631, %v629
        %v692 = vpack.c.b16 %v632, %v630
        %v693 = vpack.c.b16 %v635, %v633
        %v694 = vpack.c.b16 %v636, %v634
        %v695 = vpack.c.b16 %v639, %v637
        %v696 = vpack.c.b16 %v640, %v638
        %v697 = vpack.c.b16 %v643, %v641
        %v698 = vpack.c.b16 %v644, %v642
        %v699 = vpack.c.b16 %v647, %v645
        %v700 = vpack.c.b16 %v648, %v646
        %v701 = vpack.c.b16 %v651, %v649
        %v702 = vpack.c.b16 %v652, %v650
        %v703 = vpack.c.b16 %v655, %v653
        %v704 = vpack.c.b16 %v656, %v654
        %v705 = vpack.c.b16 %v659, %v657
        %v706 = vpack.c.b16 %v660, %v658
        %v707 = vpack.c.b16 %v663, %v661
        %v708 = vpack.c.b16 %v664, %v662
        %v709 = vpack.c.b16 %v667, %v665
        %v710 = vpack.c.b16 %v668, %v666
        %v711 = vpack.c.b16 %v671, %v669
        %v712 = vpack.c.b16 %v672, %v670
        %v713 = vpack.c.b16 %v675, %v673
        %v714 = vpack.c.b16 %v676, %v674
        %v715 = vpack.c.b16 %v679, %v677
        %v716 = vpack.c.b16 %v680, %v678
        %v717 = vpack.c.b16 %v683, %v681
        %v718 = vpack.c.b16 %v684, %v682
        %v719 = vpack.c.b16 %v687, %v685
        %v720 = vpack.c.b16 %v688, %v686
        %753 = vmatpush.bf16.msra.mxu0 %v703
        %754 = vmatpush.bf16.msra.mxu0 %v701
        %755 = vmatpush.bf16.msra.mxu0 %v699
        %756 = vmatpush.bf16.msra.mxu0 %v697
        %757 = vmatpush.bf16.msra.mxu0 %v695
        %758 = vmatpush.bf16.msra.mxu0 %v693
        %759 = vmatpush.bf16.msra.mxu0 %v691
        %760 = vmatpush.bf16.msra.mxu0 %v689
        %761 = vmatmul.bf16.gmra.mxu0 %v585
        %v762 = vpop.f32.mrf.mxu0
        %v763 = vadd.f32 %v569, %v762
        %v764 = vpop.f32.mrf.mxu0
        %v765 = vadd.f32 %v569, %v764
        %766 = vmatmul.bf16.gmra.mxu0 %v587
        %v767 = vpop.f32.mrf.mxu0
        %v768 = vadd.f32 %v569, %v767
        %v769 = vpop.f32.mrf.mxu0
        %v770 = vadd.f32 %v569, %v769
        %771 = vdwg.mxu0
        %772 = vmatpush.bf16.msra.mxu0 %v719
        %773 = vmatpush.bf16.msra.mxu0 %v717
        %774 = vmatpush.bf16.msra.mxu0 %v715
        %775 = vmatpush.bf16.msra.mxu0 %v713
        %776 = vmatpush.bf16.msra.mxu0 %v711
        %777 = vmatpush.bf16.msra.mxu0 %v709
        %778 = vmatpush.bf16.msra.mxu0 %v707
        %779 = vmatpush.bf16.msra.mxu0 %v705
        %780 = vmatmul.bf16.gmra.mxu0 %v586
        %v781 = vpop.f32.mrf.mxu0
        %v782 = vadd.f32 %v763, %v781
        %v783 = vpop.f32.mrf.mxu0
        %v784 = vadd.f32 %v765, %v783
        %785 = vmatmul.bf16.gmra.mxu0 %v588
        %v786 = vpop.f32.mrf.mxu0
        %v787 = vadd.f32 %v768, %v786
        %v788 = vpop.f32.mrf.mxu0
        %v789 = vadd.f32 %v770, %v788
        %790 = vdwg.mxu0
        %791 = vmatpush.bf16.msra.mxu0 %v704
        %792 = vmatpush.bf16.msra.mxu0 %v702
        %793 = vmatpush.bf16.msra.mxu0 %v700
        %794 = vmatpush.bf16.msra.mxu0 %v698
        %795 = vmatpush.bf16.msra.mxu0 %v696
        %796 = vmatpush.bf16.msra.mxu0 %v694
        %797 = vmatpush.bf16.msra.mxu0 %v692
        %798 = vmatpush.bf16.msra.mxu0 %v690
        %799 = vmatmul.bf16.gmra.mxu0 %v585
        %v800 = vpop.f32.mrf.mxu0
        %v801 = vadd.f32 %v570, %v800
        %v802 = vpop.f32.mrf.mxu0
        %v803 = vadd.f32 %v570, %v802
        %804 = vmatmul.bf16.gmra.mxu0 %v587
        %v805 = vpop.f32.mrf.mxu0
        %v806 = vadd.f32 %v570, %v805
        %v807 = vpop.f32.mrf.mxu0
        %v808 = vadd.f32 %v570, %v807
        %809 = vdwg.mxu0
        %810 = vmatpush.bf16.msra.mxu0 %v720
        %811 = vmatpush.bf16.msra.mxu0 %v718
        %812 = vmatpush.bf16.msra.mxu0 %v716
        %813 = vmatpush.bf16.msra.mxu0 %v714
        %814 = vmatpush.bf16.msra.mxu0 %v712
        %815 = vmatpush.bf16.msra.mxu0 %v710
        %816 = vmatpush.bf16.msra.mxu0 %v708
        %817 = vmatpush.bf16.msra.mxu0 %v706
        %818 = vmatmul.bf16.gmra.mxu0 %v586
        %v819 = vpop.f32.mrf.mxu0
        %v820 = vadd.f32 %v801, %v819
        %v821 = vpop.f32.mrf.mxu0
        %v822 = vadd.f32 %v803, %v821
        %823 = vmatmul.bf16.gmra.mxu0 %v588
        %v824 = vpop.f32.mrf.mxu0
        %v825 = vadd.f32 %v806, %v824
        %v826 = vpop.f32.mrf.mxu0
        %v827 = vadd.f32 %v808, %v826
        %828 = vdwg.mxu0
        %v829 = vmax.f32 %v782, 0.0
        %v830 = vmax.f32 %v820, 0.0
        %v831 = vmax.f32 %v784, 0.0
        %v832 = vmax.f32 %v822, 0.0
        %v833 = vmax.f32 %v787, 0.0
        %v834 = vmax.f32 %v825, 0.0
        %v835 = vmax.f32 %v789, 0.0
        %v836 = vmax.f32 %v827, 0.0
        %v837 = vpack.c.bf16 %v831, %v829
        %v838 = vpack.c.bf16 %v832, %v830
        %v839 = vpack.c.bf16 %v835, %v833
        %v840 = vpack.c.bf16 %v836, %v834
        %v841 = vld [vmem:[#allocation8] sm:$0xff]
        %v842 = vld [vmem:[#allocation8 + $0x8] sm:$0xff]
        %v843 = vld [vmem:[#allocation8 + $0x10] sm:$0xff]
        %v844 = vld [vmem:[#allocation8 + $0x18] sm:$0xff]
        %v845 = vld [vmem:[#allocation8 + $0x20] sm:$0xff]
        %v846 = vld [vmem:[#allocation8 + $0x28] sm:$0xff]
        %v847 = vld [vmem:[#allocation8 + $0x30] sm:$0xff]
        %v848 = vld [vmem:[#allocation8 + $0x38] sm:$0xff]
        %v849 = vld [vmem:[#allocation8 + $0x40] sm:$0xff]
        %v850 = vld [vmem:[#allocation8 + $0x48] sm:$0xff]
        %v851 = vld [vmem:[#allocation8 + $0x50] sm:$0xff]
        %v852 = vld [vmem:[#allocation8 + $0x58] sm:$0xff]
        %v853 = vld [vmem:[#allocation8 + $0x60] sm:$0xff]
        %v854 = vld [vmem:[#allocation8 + $0x68] sm:$0xff]
        %v855 = vld [vmem:[#allocation8 + $0x70] sm:$0xff]
        %v856 = vld [vmem:[#allocation8 + $0x78] sm:$0xff]
        %v857 = vld [vmem:[#allocation8 + $0x80] sm:$0xff]
        %v858 = vld [vmem:[#allocation8 + $0x88] sm:$0xff]
        %v859 = vld [vmem:[#allocation8 + $0x90] sm:$0xff]
        %v860 = vld [vmem:[#allocation8 + $0x98] sm:$0xff]
        %v861 = vld [vmem:[#allocation8 + $0xa0] sm:$0xff]
        %v862 = vld [vmem:[#allocation8 + $0xa8] sm:$0xff]
        %v863 = vld [vmem:[#allocation8 + $0xb0] sm:$0xff]
        %v864 = vld [vmem:[#allocation8 + $0xb8] sm:$0xff]
        %v865 = vld [vmem:[#allocation8 + $0xc0] sm:$0xff]
        %v866 = vld [vmem:[#allocation8 + $0xc8] sm:$0xff]
        %v867 = vld [vmem:[#allocation8 + $0xd0] sm:$0xff]
        %v868 = vld [vmem:[#allocation8 + $0xd8] sm:$0xff]
        %v869 = vld [vmem:[#allocation8 + $0xe0] sm:$0xff]
        %v870 = vld [vmem:[#allocation8 + $0xe8] sm:$0xff]
        %v871 = vld [vmem:[#allocation8 + $0xf0] sm:$0xff]
        %v872 = vld [vmem:[#allocation8 + $0xf8] sm:$0xff]
        %v873 = vld [vmem:[%s5] sm:$0x3]
        %v875 = vperm.slane %v873, 0
        %v876 = vperm.slane %v873, 1
        %v911 = vunpack.c.l.b16 %v841
        %v912 = vunpack.c.h.b16 %v841
        %v913 = vunpack.c.l.b16 %v842
        %v914 = vunpack.c.h.b16 %v842
        %v915 = vunpack.c.l.b16 %v843
        %v916 = vunpack.c.h.b16 %v843
        %v917 = vunpack.c.l.b16 %v844
        %v918 = vunpack.c.h.b16 %v844
        %v919 = vunpack.c.l.b16 %v845
        %v920 = vunpack.c.h.b16 %v845
        %v921 = vunpack.c.l.b16 %v846
        %v922 = vunpack.c.h.b16 %v846
        %v923 = vunpack.c.l.b16 %v847
        %v924 = vunpack.c.h.b16 %v847
        %v925 = vunpack.c.l.b16 %v848
        %v926 = vunpack.c.h.b16 %v848
        %v927 = vunpack.c.l.b16 %v849
        %v928 = vunpack.c.h.b16 %v849
        %v929 = vunpack.c.l.b16 %v850
        %v930 = vunpack.c.h.b16 %v850
        %v931 = vunpack.c.l.b16 %v851
        %v932 = vunpack.c.h.b16 %v851
        %v933 = vunpack.c.l.b16 %v852
        %v934 = vunpack.c.h.b16 %v852
        %v935 = vunpack.c.l.b16 %v853
        %v936 = vunpack.c.h.b16 %v853
        %v937 = vunpack.c.l.b16 %v854
        %v938 = vunpack.c.h.b16 %v854
        %v939 = vunpack.c.l.b16 %v855
        %v940 = vunpack.c.h.b16 %v855
        %v941 = vunpack.c.l.b16 %v856
        %v942 = vunpack.c.h.b16 %v856
        %v943 = vunpack.c.l.b16 %v857
        %v944 = vunpack.c.h.b16 %v857
        %v945 = vunpack.c.l.b16 %v858
        %v946 = vunpack.c.h.b16 %v858
        %v947 = vunpack.c.l.b16 %v859
        %v948 = vunpack.c.h.b16 %v859
        %v949 = vunpack.c.l.b16 %v860
        %v950 = vunpack.c.h.b16 %v860
        %v951 = vunpack.c.l.b16 %v861
        %v952 = vunpack.c.h.b16 %v861
        %v953 = vunpack.c.l.b16 %v862
        %v954 = vunpack.c.h.b16 %v862
        %v955 = vunpack.c.l.b16 %v863
        %v956 = vunpack.c.h.b16 %v863
        %v957 = vunpack.c.l.b16 %v864
        %v958 = vunpack.c.h.b16 %v864
        %v959 = vunpack.c.l.b16 %v865
        %v960 = vunpack.c.h.b16 %v865
        %v961 = vunpack.c.l.b16 %v866
        %v962 = vunpack.c.h.b16 %v866
        %v963 = vunpack.c.l.b16 %v867
        %v964 = vunpack.c.h.b16 %v867
        %v965 = vunpack.c.l.b16 %v868
        %v966 = vunpack.c.h.b16 %v868
        %v967 = vunpack.c.l.b16 %v869
        %v968 = vunpack.c.h.b16 %v869
        %v969 = vunpack.c.l.b16 %v870
        %v970 = vunpack.c.h.b16 %v870
        %v971 = vunpack.c.l.b16 %v871
        %v972 = vunpack.c.h.b16 %v871
        %v973 = vunpack.c.l.b16 %v872
        %v974 = vunpack.c.h.b16 %v872
        %v975 = vpack.c.b16 %v913, %v911
        %v976 = vpack.c.b16 %v914, %v912
        %v977 = vpack.c.b16 %v917, %v915
        %v978 = vpack.c.b16 %v918, %v916
        %v979 = vpack.c.b16 %v921, %v919
        %v980 = vpack.c.b16 %v922, %v920
        %v981 = vpack.c.b16 %v925, %v923
        %v982 = vpack.c.b16 %v926, %v924
        %v983 = vpack.c.b16 %v929, %v927
        %v984 = vpack.c.b16 %v930, %v928
        %v985 = vpack.c.b16 %v933, %v931
        %v986 = vpack.c.b16 %v934, %v932
        %v987 = vpack.c.b16 %v937, %v935
        %v988 = vpack.c.b16 %v938, %v936
        %v989 = vpack.c.b16 %v941, %v939
        %v990 = vpack.c.b16 %v942, %v940
        %v991 = vpack.c.b16 %v945, %v943
        %v992 = vpack.c.b16 %v946, %v944
        %v993 = vpack.c.b16 %v949, %v947
        %v994 = vpack.c.b16 %v950, %v948
        %v995 = vpack.c.b16 %v953, %v951
        %v996 = vpack.c.b16 %v954, %v952
        %v997 = vpack.c.b16 %v957, %v955
        %v998 = vpack.c.b16 %v958, %v956
        %v999 = vpack.c.b16 %v961, %v959
        %v1000 = vpack.c.b16 %v962, %v960
        %v1001 = vpack.c.b16 %v965, %v963
        %v1002 = vpack.c.b16 %v966, %v964
        %v1003 = vpack.c.b16 %v969, %v967
        %v1004 = vpack.c.b16 %v970, %v968
        %v1005 = vpack.c.b16 %v973, %v971
        %v1006 = vpack.c.b16 %v974, %v972
        %1039 = vmatpush.bf16.msra.mxu0 %v989
        %1040 = vmatpush.bf16.msra.mxu0 %v987
        %1041 = vmatpush.bf16.msra.mxu0 %v985
        %1042 = vmatpush.bf16.msra.mxu0 %v983
        %1043 = vmatpush.bf16.msra.mxu0 %v981
        %1044 = vmatpush.bf16.msra.mxu0 %v979
        %1045 = vmatpush.bf16.msra.mxu0 %v977
        %1046 = vmatpush.bf16.msra.mxu0 %v975
        %1047 = vmatmul.bf16.gmra.mxu0 %v837
        %v1048 = vpop.f32.mrf.mxu0
        %v1049 = vadd.f32 %v875, %v1048
        %v1050 = vpop.f32.mrf.mxu0
        %v1051 = vadd.f32 %v875, %v1050
        %1052 = vmatmul.bf16.gmra.mxu0 %v839
        %v1053 = vpop.f32.mrf.mxu0
        %v1054 = vadd.f32 %v875, %v1053
        %v1055 = vpop.f32.mrf.mxu0
        %v1056 = vadd.f32 %v875, %v1055
        %1057 = vdwg.mxu0
        %1058 = vmatpush.bf16.msra.mxu0 %v1005
        %1059 = vmatpush.bf16.msra.mxu0 %v1003
        %1060 = vmatpush.bf16.msra.mxu0 %v1001
        %1061 = vmatpush.bf16.msra.mxu0 %v999
        %1062 = vmatpush.bf16.msra.mxu0 %v997
        %1063 = vmatpush.bf16.msra.mxu0 %v995
        %1064 = vmatpush.bf16.msra.mxu0 %v993
        %1065 = vmatpush.bf16.msra.mxu0 %v991
        %1066 = vmatmul.bf16.gmra.mxu0 %v838
        %v1067 = vpop.f32.mrf.mxu0
        %v1068 = vadd.f32 %v1049, %v1067
        %v1069 = vpop.f32.mrf.mxu0
        %v1070 = vadd.f32 %v1051, %v1069
        %1071 = vmatmul.bf16.gmra.mxu0 %v840
        %v1072 = vpop.f32.mrf.mxu0
        %v1073 = vadd.f32 %v1054, %v1072
        %v1074 = vpop.f32.mrf.mxu0
        %v1075 = vadd.f32 %v1056, %v1074
        %1076 = vdwg.mxu0
        %1077 = vmatpush.bf16.msra.mxu0 %v990
        %1078 = vmatpush.bf16.msra.mxu0 %v988
        %1079 = vmatpush.bf16.msra.mxu0 %v986
        %1080 = vmatpush.bf16.msra.mxu0 %v984
        %1081 = vmatpush.bf16.msra.mxu0 %v982
        %1082 = vmatpush.bf16.msra.mxu0 %v980
        %1083 = vmatpush.bf16.msra.mxu0 %v978
        %1084 = vmatpush.bf16.msra.mxu0 %v976
        %1085 = vmatmul.bf16.gmra.mxu0 %v837
        %v1086 = vpop.f32.mrf.mxu0
        %v1087 = vadd.f32 %v876, %v1086
        %v1088 = vpop.f32.mrf.mxu0
        %v1089 = vadd.f32 %v876, %v1088
        %1090 = vmatmul.bf16.gmra.mxu0 %v839
        %v1091 = vpop.f32.mrf.mxu0
        %v1092 = vadd.f32 %v876, %v1091
        %v1093 = vpop.f32.mrf.mxu0
        %v1094 = vadd.f32 %v876, %v1093
        %1095 = vdwg.mxu0
        %1096 = vmatpush.bf16.msra.mxu0 %v1006
        %1097 = vmatpush.bf16.msra.mxu0 %v1004
        %1098 = vmatpush.bf16.msra.mxu0 %v1002
        %1099 = vmatpush.bf16.msra.mxu0 %v1000
        %1100 = vmatpush.bf16.msra.mxu0 %v998
        %1101 = vmatpush.bf16.msra.mxu0 %v996
        %1102 = vmatpush.bf16.msra.mxu0 %v994
        %1103 = vmatpush.bf16.msra.mxu0 %v992
        %1104 = vmatmul.bf16.gmra.mxu0 %v838
        %v1105 = vpop.f32.mrf.mxu0
        %v1106 = vadd.f32 %v1087, %v1105
        %v1107 = vpop.f32.mrf.mxu0
        %v1108 = vadd.f32 %v1089, %v1107
        %1109 = vmatmul.bf16.gmra.mxu0 %v840
        %v1110 = vpop.f32.mrf.mxu0
        %v1111 = vadd.f32 %v1092, %v1110
        %v1112 = vpop.f32.mrf.mxu0
        %v1113 = vadd.f32 %v1094, %v1112
        %1114 = vdwg.mxu0
        %v1115 = vmul.f32 %v1106, 0.5
        %v1116 = vmul.f32 %v1108, 0.5
        %v1117 = vmul.f32 %v1111, 0.5
        %v1118 = vmul.f32 %v1113, 0.5
        %v1119 = vmul.f32 %v1115, 1.442695
        %v1120 = vpow.pop %v1119
        %v1121 = vmul.f32 %v1116, 1.442695
        %v1122 = vpow.pop %v1121
        %v1123 = vmul.f32 %v1117, 1.442695
        %v1124 = vpow.pop %v1123
        %v1125 = vmul.f32 %v1118, 1.442695
        %v1126 = vpow.pop %v1125
        %v1127 = vld [vmem:[%s457] sm:$0xff]
        %v1128 = vld [vmem:[%s457 + $0x8] sm:$0xff]
        %v1129 = vld [vmem:[%s457 + $0x10] sm:$0xff]
        %v1130 = vld [vmem:[%s457 + $0x18] sm:$0xff]
        %v1131 = vmul.f32 %v1127, %v1120
        %v1132 = vmul.f32 %v1128, %v1122
        %v1133 = vmul.f32 %v1129, %v1124
        %v1134 = vmul.f32 %v1130, %v1126
        %v1135 = vadd.f32 %v1131, %v1068
        %v1136 = vadd.f32 %v1132, %v1070
        %v1137 = vadd.f32 %v1133, %v1073
        %v1138 = vadd.f32 %v1134, %v1075
        %v1139 = vpack.c.bf16 %v1136, %v1135
        %v1140 = vpack.c.bf16 %v1138, %v1137
        %v1141 = vld [vmem:[#allocation10] sm:$0xff]
        %v1142 = vld [vmem:[#allocation10 + $0x8] sm:$0xff]
        %v1143 = vld [vmem:[#allocation10 + $0x10] sm:$0xff]
        %v1144 = vld [vmem:[#allocation10 + $0x18] sm:$0xff]
        %v1145 = vld [vmem:[#allocation10 + $0x20] sm:$0xff]
        %v1146 = vld [vmem:[#allocation10 + $0x28] sm:$0xff]
        %v1147 = vld [vmem:[#allocation10 + $0x30] sm:$0xff]
        %v1148 = vld [vmem:[#allocation10 + $0x38] sm:$0xff]
        %v1149 = vld [vmem:[#allocation10 + $0x40] sm:$0xff]
        %v1150 = vld [vmem:[#allocation10 + $0x48] sm:$0xff]
        %v1151 = vld [vmem:[#allocation10 + $0x50] sm:$0xff]
        %v1152 = vld [vmem:[#allocation10 + $0x58] sm:$0xff]
        %v1153 = vld [vmem:[#allocation10 + $0x60] sm:$0xff]
        %v1154 = vld [vmem:[#allocation10 + $0x68] sm:$0xff]
        %v1155 = vld [vmem:[#allocation10 + $0x70] sm:$0xff]
        %v1156 = vld [vmem:[#allocation10 + $0x78] sm:$0xff]
        %v1157 = vld [vmem:[%s7] sm:$0x3]
        %v1159 = vperm.slane %v1157, 0
        %v1160 = vperm.slane %v1157, 1
        %v1179 = vunpack.c.l.b16 %v1141
        %v1180 = vunpack.c.h.b16 %v1141
        %v1181 = vunpack.c.l.b16 %v1142
        %v1182 = vunpack.c.h.b16 %v1142
        %v1183 = vunpack.c.l.b16 %v1143
        %v1184 = vunpack.c.h.b16 %v1143
        %v1185 = vunpack.c.l.b16 %v1144
        %v1186 = vunpack.c.h.b16 %v1144
        %v1187 = vunpack.c.l.b16 %v1145
        %v1188 = vunpack.c.h.b16 %v1145
        %v1189 = vunpack.c.l.b16 %v1146
        %v1190 = vunpack.c.h.b16 %v1146
        %v1191 = vunpack.c.l.b16 %v1147
        %v1192 = vunpack.c.h.b16 %v1147
        %v1193 = vunpack.c.l.b16 %v1148
        %v1194 = vunpack.c.h.b16 %v1148
        %v1195 = vunpack.c.l.b16 %v1149
        %v1196 = vunpack.c.h.b16 %v1149
        %v1197 = vunpack.c.l.b16 %v1150
        %v1198 = vunpack.c.h.b16 %v1150
        %v1199 = vunpack.c.l.b16 %v1151
        %v1200 = vunpack.c.h.b16 %v1151
        %v1201 = vunpack.c.l.b16 %v1152
        %v1202 = vunpack.c.h.b16 %v1152
        %v1203 = vunpack.c.l.b16 %v1153
        %v1204 = vunpack.c.h.b16 %v1153
        %v1205 = vunpack.c.l.b16 %v1154
        %v1206 = vunpack.c.h.b16 %v1154
        %v1207 = vunpack.c.l.b16 %v1155
        %v1208 = vunpack.c.h.b16 %v1155
        %v1209 = vunpack.c.l.b16 %v1156
        %v1210 = vunpack.c.h.b16 %v1156
        %v1211 = vpack.c.b16 %v1181, %v1179
        %v1212 = vpack.c.b16 %v1182, %v1180
        %v1213 = vpack.c.b16 %v1185, %v1183
        %v1214 = vpack.c.b16 %v1186, %v1184
        %v1215 = vpack.c.b16 %v1189, %v1187
        %v1216 = vpack.c.b16 %v1190, %v1188
        %v1217 = vpack.c.b16 %v1193, %v1191
        %v1218 = vpack.c.b16 %v1194, %v1192
        %v1219 = vpack.c.b16 %v1197, %v1195
        %v1220 = vpack.c.b16 %v1198, %v1196
        %v1221 = vpack.c.b16 %v1201, %v1199
        %v1222 = vpack.c.b16 %v1202, %v1200
        %v1223 = vpack.c.b16 %v1205, %v1203
        %v1224 = vpack.c.b16 %v1206, %v1204
        %v1225 = vpack.c.b16 %v1209, %v1207
        %v1226 = vpack.c.b16 %v1210, %v1208
        %1243 = vmatpush.bf16.msra.mxu0 %v1225
        %1244 = vmatpush.bf16.msra.mxu0 %v1223
        %1245 = vmatpush.bf16.msra.mxu0 %v1221
        %1246 = vmatpush.bf16.msra.mxu0 %v1219
        %1247 = vmatpush.bf16.msra.mxu0 %v1217
        %1248 = vmatpush.bf16.msra.mxu0 %v1215
        %1249 = vmatpush.bf16.msra.mxu0 %v1213
        %1250 = vmatpush.bf16.msra.mxu0 %v1211
        %1251 = vmatmul.bf16.gmra.mxu0 %v1139
        %v1252 = vpop.f32.mrf.mxu0
        %v1253 = vadd.f32 %v1159, %v1252
        %v1254 = vpop.f32.mrf.mxu0
        %v1255 = vadd.f32 %v1159, %v1254
        %1256 = vmatmul.bf16.gmra.mxu0 %v1140
        %v1257 = vpop.f32.mrf.mxu0
        %v1258 = vadd.f32 %v1159, %v1257
        %v1259 = vpop.f32.mrf.mxu0
        %v1260 = vadd.f32 %v1159, %v1259
        %1261 = vdwg.mxu0
        %1262 = vmatpush.bf16.msra.mxu0 %v1226
        %1263 = vmatpush.bf16.msra.mxu0 %v1224
        %1264 = vmatpush.bf16.msra.mxu0 %v1222
        %1265 = vmatpush.bf16.msra.mxu0 %v1220
        %1266 = vmatpush.bf16.msra.mxu0 %v1218
        %1267 = vmatpush.bf16.msra.mxu0 %v1216
        %1268 = vmatpush.bf16.msra.mxu0 %v1214
        %1269 = vmatpush.bf16.msra.mxu0 %v1212
        %1270 = vmatmul.bf16.gmra.mxu0 %v1139
        %v1271 = vpop.f32.mrf.mxu0
        %v1272 = vadd.f32 %v1160, %v1271
        %v1273 = vpop.f32.mrf.mxu0
        %v1274 = vadd.f32 %v1160, %v1273
        %1275 = vmatmul.bf16.gmra.mxu0 %v1140
        %v1276 = vpop.f32.mrf.mxu0
        %v1277 = vadd.f32 %v1160, %v1276
        %v1278 = vpop.f32.mrf.mxu0
        %v1279 = vadd.f32 %v1160, %v1278
        %1280 = vdwg.mxu0
        %v1281 = vmax.f32 %v1253, 0.0
        %v1282 = vmax.f32 %v1272, 0.0
        %v1283 = vmax.f32 %v1255, 0.0
        %v1284 = vmax.f32 %v1274, 0.0
        %v1285 = vmax.f32 %v1258, 0.0
        %v1286 = vmax.f32 %v1277, 0.0
        %v1287 = vmax.f32 %v1260, 0.0
        %v1288 = vmax.f32 %v1279, 0.0
        %v1289 = vpack.c.bf16 %v1283, %v1281
        %v1290 = vpack.c.bf16 %v1284, %v1282
        %v1291 = vpack.c.bf16 %v1287, %v1285
        %v1292 = vpack.c.bf16 %v1288, %v1286
        %v1293 = vld [vmem:[#allocation11] sm:$0xff]
        %v1294 = vld [vmem:[#allocation11 + $0x8] sm:$0xff]
        %v1295 = vld [vmem:[#allocation11 + $0x10] sm:$0xff]
        %v1296 = vld [vmem:[#allocation11 + $0x18] sm:$0xff]
        %v1297 = vld [vmem:[#allocation11 + $0x20] sm:$0xff]
        %v1298 = vld [vmem:[#allocation11 + $0x28] sm:$0xff]
        %v1299 = vld [vmem:[#allocation11 + $0x30] sm:$0xff]
        %v1300 = vld [vmem:[#allocation11 + $0x38] sm:$0xff]
        %v1301 = vld [vmem:[#allocation11 + $0x40] sm:$0xff]
        %v1302 = vld [vmem:[#allocation11 + $0x48] sm:$0xff]
        %v1303 = vld [vmem:[#allocation11 + $0x50] sm:$0xff]
        %v1304 = vld [vmem:[#allocation11 + $0x58] sm:$0xff]
        %v1305 = vld [vmem:[#allocation11 + $0x60] sm:$0xff]
        %v1306 = vld [vmem:[#allocation11 + $0x68] sm:$0xff]
        %v1307 = vld [vmem:[#allocation11 + $0x70] sm:$0xff]
        %v1308 = vld [vmem:[#allocation11 + $0x78] sm:$0xff]
        %v1309 = vld [vmem:[#allocation11 + $0x80] sm:$0xff]
        %v1310 = vld [vmem:[#allocation11 + $0x88] sm:$0xff]
        %v1311 = vld [vmem:[#allocation11 + $0x90] sm:$0xff]
        %v1312 = vld [vmem:[#allocation11 + $0x98] sm:$0xff]
        %v1313 = vld [vmem:[#allocation11 + $0xa0] sm:$0xff]
        %v1314 = vld [vmem:[#allocation11 + $0xa8] sm:$0xff]
        %v1315 = vld [vmem:[#allocation11 + $0xb0] sm:$0xff]
        %v1316 = vld [vmem:[#allocation11 + $0xb8] sm:$0xff]
        %v1317 = vld [vmem:[#allocation11 + $0xc0] sm:$0xff]
        %v1318 = vld [vmem:[#allocation11 + $0xc8] sm:$0xff]
        %v1319 = vld [vmem:[#allocation11 + $0xd0] sm:$0xff]
        %v1320 = vld [vmem:[#allocation11 + $0xd8] sm:$0xff]
        %v1321 = vld [vmem:[#allocation11 + $0xe0] sm:$0xff]
        %v1322 = vld [vmem:[#allocation11 + $0xe8] sm:$0xff]
        %v1323 = vld [vmem:[#allocation11 + $0xf0] sm:$0xff]
        %v1324 = vld [vmem:[#allocation11 + $0xf8] sm:$0xff]
        %v1325 = vld [vmem:[%s9] sm:$0x3]
        %v1327 = vperm.slane %v1325, 0
        %v1328 = vperm.slane %v1325, 1
        %v1363 = vunpack.c.l.b16 %v1293
        %v1364 = vunpack.c.h.b16 %v1293
        %v1365 = vunpack.c.l.b16 %v1294
        %v1366 = vunpack.c.h.b16 %v1294
        %v1367 = vunpack.c.l.b16 %v1295
        %v1368 = vunpack.c.h.b16 %v1295
        %v1369 = vunpack.c.l.b16 %v1296
        %v1370 = vunpack.c.h.b16 %v1296
        %v1371 = vunpack.c.l.b16 %v1297
        %v1372 = vunpack.c.h.b16 %v1297
        %v1373 = vunpack.c.l.b16 %v1298
        %v1374 = vunpack.c.h.b16 %v1298
        %v1375 = vunpack.c.l.b16 %v1299
        %v1376 = vunpack.c.h.b16 %v1299
        %v1377 = vunpack.c.l.b16 %v1300
        %v1378 = vunpack.c.h.b16 %v1300
        %v1379 = vunpack.c.l.b16 %v1301
        %v1380 = vunpack.c.h.b16 %v1301
        %v1381 = vunpack.c.l.b16 %v1302
        %v1382 = vunpack.c.h.b16 %v1302
        %v1383 = vunpack.c.l.b16 %v1303
        %v1384 = vunpack.c.h.b16 %v1303
        %v1385 = vunpack.c.l.b16 %v1304
        %v1386 = vunpack.c.h.b16 %v1304
        %v1387 = vunpack.c.l.b16 %v1305
        %v1388 = vunpack.c.h.b16 %v1305
        %v1389 = vunpack.c.l.b16 %v1306
        %v1390 = vunpack.c.h.b16 %v1306
        %v1391 = vunpack.c.l.b16 %v1307
        %v1392 = vunpack.c.h.b16 %v1307
        %v1393 = vunpack.c.l.b16 %v1308
        %v1394 = vunpack.c.h.b16 %v1308
        %v1395 = vunpack.c.l.b16 %v1309
        %v1396 = vunpack.c.h.b16 %v1309
        %v1397 = vunpack.c.l.b16 %v1310
        %v1398 = vunpack.c.h.b16 %v1310
        %v1399 = vunpack.c.l.b16 %v1311
        %v1400 = vunpack.c.h.b16 %v1311
        %v1401 = vunpack.c.l.b16 %v1312
        %v1402 = vunpack.c.h.b16 %v1312
        %v1403 = vunpack.c.l.b16 %v1313
        %v1404 = vunpack.c.h.b16 %v1313
        %v1405 = vunpack.c.l.b16 %v1314
        %v1406 = vunpack.c.h.b16 %v1314
        %v1407 = vunpack.c.l.b16 %v1315
        %v1408 = vunpack.c.h.b16 %v1315
        %v1409 = vunpack.c.l.b16 %v1316
        %v1410 = vunpack.c.h.b16 %v1316
        %v1411 = vunpack.c.l.b16 %v1317
        %v1412 = vunpack.c.h.b16 %v1317
        %v1413 = vunpack.c.l.b16 %v1318
        %v1414 = vunpack.c.h.b16 %v1318
        %v1415 = vunpack.c.l.b16 %v1319
        %v1416 = vunpack.c.h.b16 %v1319
        %v1417 = vunpack.c.l.b16 %v1320
        %v1418 = vunpack.c.h.b16 %v1320
        %v1419 = vunpack.c.l.b16 %v1321
        %v1420 = vunpack.c.h.b16 %v1321
        %v1421 = vunpack.c.l.b16 %v1322
        %v1422 = vunpack.c.h.b16 %v1322
        %v1423 = vunpack.c.l.b16 %v1323
        %v1424 = vunpack.c.h.b16 %v1323
        %v1425 = vunpack.c.l.b16 %v1324
        %v1426 = vunpack.c.h.b16 %v1324
        %v1427 = vpack.c.b16 %v1365, %v1363
        %v1428 = vpack.c.b16 %v1366, %v1364
        %v1429 = vpack.c.b16 %v1369, %v1367
        %v1430 = vpack.c.b16 %v1370, %v1368
        %v1431 = vpack.c.b16 %v1373, %v1371
        %v1432 = vpack.c.b16 %v1374, %v1372
        %v1433 = vpack.c.b16 %v1377, %v1375
        %v1434 = vpack.c.b16 %v1378, %v1376
        %v1435 = vpack.c.b16 %v1381, %v1379
        %v1436 = vpack.c.b16 %v1382, %v1380
        %v1437 = vpack.c.b16 %v1385, %v1383
        %v1438 = vpack.c.b16 %v1386, %v1384
        %v1439 = vpack.c.b16 %v1389, %v1387
        %v1440 = vpack.c.b16 %v1390, %v1388
        %v1441 = vpack.c.b16 %v1393, %v1391
        %v1442 = vpack.c.b16 %v1394, %v1392
        %v1443 = vpack.c.b16 %v1397, %v1395
        %v1444 = vpack.c.b16 %v1398, %v1396
        %v1445 = vpack.c.b16 %v1401, %v1399
        %v1446 = vpack.c.b16 %v1402, %v1400
        %v1447 = vpack.c.b16 %v1405, %v1403
        %v1448 = vpack.c.b16 %v1406, %v1404
        %v1449 = vpack.c.b16 %v1409, %v1407
        %v1450 = vpack.c.b16 %v1410, %v1408
        %v1451 = vpack.c.b16 %v1413, %v1411
        %v1452 = vpack.c.b16 %v1414, %v1412
        %v1453 = vpack.c.b16 %v1417, %v1415
        %v1454 = vpack.c.b16 %v1418, %v1416
        %v1455 = vpack.c.b16 %v1421, %v1419
        %v1456 = vpack.c.b16 %v1422, %v1420
        %v1457 = vpack.c.b16 %v1425, %v1423
        %v1458 = vpack.c.b16 %v1426, %v1424
        %1491 = vmatpush.bf16.msra.mxu0 %v1441
        %1492 = vmatpush.bf16.msra.mxu0 %v1439
        %1493 = vmatpush.bf16.msra.mxu0 %v1437
        %1494 = vmatpush.bf16.msra.mxu0 %v1435
        %1495 = vmatpush.bf16.msra.mxu0 %v1433
        %1496 = vmatpush.bf16.msra.mxu0 %v1431
        %1497 = vmatpush.bf16.msra.mxu0 %v1429
        %1498 = vmatpush.bf16.msra.mxu0 %v1427
        %1499 = vmatmul.bf16.gmra.mxu0 %v1289
        %v1500 = vpop.f32.mrf.mxu0
        %v1501 = vadd.f32 %v1327, %v1500
        %v1502 = vpop.f32.mrf.mxu0
        %v1503 = vadd.f32 %v1327, %v1502
        %1504 = vmatmul.bf16.gmra.mxu0 %v1291
        %v1505 = vpop.f32.mrf.mxu0
        %v1506 = vadd.f32 %v1327, %v1505
        %v1507 = vpop.f32.mrf.mxu0
        %v1508 = vadd.f32 %v1327, %v1507
        %1509 = vdwg.mxu0
        %1510 = vmatpush.bf16.msra.mxu0 %v1457
        %1511 = vmatpush.bf16.msra.mxu0 %v1455
        %1512 = vmatpush.bf16.msra.mxu0 %v1453
        %1513 = vmatpush.bf16.msra.mxu0 %v1451
        %1514 = vmatpush.bf16.msra.mxu0 %v1449
        %1515 = vmatpush.bf16.msra.mxu0 %v1447
        %1516 = vmatpush.bf16.msra.mxu0 %v1445
        %1517 = vmatpush.bf16.msra.mxu0 %v1443
        %1518 = vmatmul.bf16.gmra.mxu0 %v1290
        %v1519 = vpop.f32.mrf.mxu0
        %v1520 = vadd.f32 %v1501, %v1519
        %v1521 = vpop.f32.mrf.mxu0
        %v1522 = vadd.f32 %v1503, %v1521
        %1523 = vmatmul.bf16.gmra.mxu0 %v1292
        %v1524 = vpop.f32.mrf.mxu0
        %v1525 = vadd.f32 %v1506, %v1524
        %v1526 = vpop.f32.mrf.mxu0
        %v1527 = vadd.f32 %v1508, %v1526
        %1528 = vdwg.mxu0
        %1529 = vmatpush.bf16.msra.mxu0 %v1442
        %1530 = vmatpush.bf16.msra.mxu0 %v1440
        %1531 = vmatpush.bf16.msra.mxu0 %v1438
        %1532 = vmatpush.bf16.msra.mxu0 %v1436
        %1533 = vmatpush.bf16.msra.mxu0 %v1434
        %1534 = vmatpush.bf16.msra.mxu0 %v1432
        %1535 = vmatpush.bf16.msra.mxu0 %v1430
        %1536 = vmatpush.bf16.msra.mxu0 %v1428
        %1537 = vmatmul.bf16.gmra.mxu0 %v1289
        %v1538 = vpop.f32.mrf.mxu0
        %v1539 = vadd.f32 %v1328, %v1538
        %v1540 = vpop.f32.mrf.mxu0
        %v1541 = vadd.f32 %v1328, %v1540
        %1542 = vmatmul.bf16.gmra.mxu0 %v1291
        %v1543 = vpop.f32.mrf.mxu0
        %v1544 = vadd.f32 %v1328, %v1543
        %v1545 = vpop.f32.mrf.mxu0
        %v1546 = vadd.f32 %v1328, %v1545
        %1547 = vdwg.mxu0
        %1548 = vmatpush.bf16.msra.mxu0 %v1458
        %1549 = vmatpush.bf16.msra.mxu0 %v1456
        %1550 = vmatpush.bf16.msra.mxu0 %v1454
        %1551 = vmatpush.bf16.msra.mxu0 %v1452
        %1552 = vmatpush.bf16.msra.mxu0 %v1450
        %1553 = vmatpush.bf16.msra.mxu0 %v1448
        %1554 = vmatpush.bf16.msra.mxu0 %v1446
        %1555 = vmatpush.bf16.msra.mxu0 %v1444
        %1556 = vmatmul.bf16.gmra.mxu0 %v1290
        %v1557 = vpop.f32.mrf.mxu0
        %v1558 = vadd.f32 %v1539, %v1557
        %v1559 = vpop.f32.mrf.mxu0
        %v1560 = vadd.f32 %v1541, %v1559
        %1561 = vmatmul.bf16.gmra.mxu0 %v1292
        %v1562 = vpop.f32.mrf.mxu0
        %v1563 = vadd.f32 %v1544, %v1562
        %v1564 = vpop.f32.mrf.mxu0
        %v1565 = vadd.f32 %v1546, %v1564
        %1566 = vdwg.mxu0
        %v1567 = vsub.f32 0.0, %v1520
        %v1568 = vsub.f32 0.0, %v1558
        %v1569 = vsub.f32 0.0, %v1522
        %v1570 = vsub.f32 0.0, %v1560
        %v1571 = vsub.f32 0.0, %v1525
        %v1572 = vsub.f32 0.0, %v1563
        %v1573 = vsub.f32 0.0, %v1527
        %v1574 = vsub.f32 0.0, %v1565
        %v1575 = vmul.f32 %v1567, 1.442695
        %v1576 = vpow.pop %v1575
        %v1577 = vmul.f32 %v1568, 1.442695
        %v1578 = vpow.pop %v1577
        %v1579 = vmul.f32 %v1569, 1.442695
        %v1580 = vpow.pop %v1579
        %v1581 = vmul.f32 %v1570, 1.442695
        %v1582 = vpow.pop %v1581
        %v1583 = vmul.f32 %v1571, 1.442695
        %v1584 = vpow.pop %v1583
        %v1585 = vmul.f32 %v1572, 1.442695
        %v1586 = vpow.pop %v1585
        %v1587 = vmul.f32 %v1573, 1.442695
        %v1588 = vpow.pop %v1587
        %v1589 = vmul.f32 %v1574, 1.442695
        %v1590 = vpow.pop %v1589
        %v1591 = vadd.f32 %v1576, 1.0
        %v1592 = vadd.f32 %v1578, 1.0
        %v1593 = vadd.f32 %v1580, 1.0
        %v1594 = vadd.f32 %v1582, 1.0
        %v1595 = vadd.f32 %v1584, 1.0
        %v1596 = vadd.f32 %v1586, 1.0
        %v1597 = vadd.f32 %v1588, 1.0
        %v1598 = vadd.f32 %v1590, 1.0
        %v1599 = vrcp.pop %v1591
        %v1600 = vmul.f32 %v1591, %v1599
        %v1601 = vsub.f32 1.0, %v1600
        %v1602 = vmul.f32 %v1599, %v1601
        %v1603 = vadd.f32 %v1599, %v1602
        %vm1604 = vweird.f32 %v1591
        %vm1605 = vweird.f32 %v1599
        %vm1606 = vmor %vm1604, %vm1605
        %v1607 = vsel %vm1606, %v1599, %v1603
        %v1608 = vand.u32 2147483647, %v1591
        %vm1609 = vcmp.eq.f32.partialorder %v1608, 8.507059e+37
        %v1610 = vand.u32 %v1591, 2147483648
        %v1611 = vor.u32 1.1754944e-38, %v1610
        %v1612 = vsel %vm1609, %v1611, %v1607
        %v1613 = vrcp.pop %v1592
        %v1614 = vmul.f32 %v1592, %v1613
        %v1615 = vsub.f32 1.0, %v1614
        %v1616 = vmul.f32 %v1613, %v1615
        %v1617 = vadd.f32 %v1613, %v1616
        %vm1618 = vweird.f32 %v1592
        %vm1619 = vweird.f32 %v1613
        %vm1620 = vmor %vm1618, %vm1619
        %v1621 = vsel %vm1620, %v1613, %v1617
        %v1622 = vand.u32 2147483647, %v1592
        %vm1623 = vcmp.eq.f32.partialorder %v1622, 8.507059e+37
        %v1624 = vand.u32 %v1592, 2147483648
        %v1625 = vor.u32 1.1754944e-38, %v1624
        %v1626 = vsel %vm1623, %v1625, %v1621
        %v1627 = vrcp.pop %v1593
        %v1628 = vmul.f32 %v1593, %v1627
        %v1629 = vsub.f32 1.0, %v1628
        %v1630 = vmul.f32 %v1627, %v1629
        %v1631 = vadd.f32 %v1627, %v1630
        %vm1632 = vweird.f32 %v1593
        %vm1633 = vweird.f32 %v1627
        %vm1634 = vmor %vm1632, %vm1633
        %v1635 = vsel %vm1634, %v1627, %v1631
        %v1636 = vand.u32 2147483647, %v1593
        %vm1637 = vcmp.eq.f32.partialorder %v1636, 8.507059e+37
        %v1638 = vand.u32 %v1593, 2147483648
        %v1639 = vor.u32 1.1754944e-38, %v1638
        %v1640 = vsel %vm1637, %v1639, %v1635
        %v1641 = vrcp.pop %v1594
        %v1642 = vmul.f32 %v1594, %v1641
        %v1643 = vsub.f32 1.0, %v1642
        %v1644 = vmul.f32 %v1641, %v1643
        %v1645 = vadd.f32 %v1641, %v1644
        %vm1646 = vweird.f32 %v1594
        %vm1647 = vweird.f32 %v1641
        %vm1648 = vmor %vm1646, %vm1647
        %v1649 = vsel %vm1648, %v1641, %v1645
        %v1650 = vand.u32 2147483647, %v1594
        %vm1651 = vcmp.eq.f32.partialorder %v1650, 8.507059e+37
        %v1652 = vand.u32 %v1594, 2147483648
        %v1653 = vor.u32 1.1754944e-38, %v1652
        %v1654 = vsel %vm1651, %v1653, %v1649
        %v1655 = vrcp.pop %v1595
        %v1656 = vmul.f32 %v1595, %v1655
        %v1657 = vsub.f32 1.0, %v1656
        %v1658 = vmul.f32 %v1655, %v1657
        %v1659 = vadd.f32 %v1655, %v1658
        %vm1660 = vweird.f32 %v1595
        %vm1661 = vweird.f32 %v1655
        %vm1662 = vmor %vm1660, %vm1661
        %v1663 = vsel %vm1662, %v1655, %v1659
        %v1664 = vand.u32 2147483647, %v1595
        %vm1665 = vcmp.eq.f32.partialorder %v1664, 8.507059e+37
        %v1666 = vand.u32 %v1595, 2147483648
        %v1667 = vor.u32 1.1754944e-38, %v1666
        %v1668 = vsel %vm1665, %v1667, %v1663
        %v1669 = vrcp.pop %v1596
        %v1670 = vmul.f32 %v1596, %v1669
        %v1671 = vsub.f32 1.0, %v1670
        %v1672 = vmul.f32 %v1669, %v1671
        %v1673 = vadd.f32 %v1669, %v1672
        %vm1674 = vweird.f32 %v1596
        %vm1675 = vweird.f32 %v1669
        %vm1676 = vmor %vm1674, %vm1675
        %v1677 = vsel %vm1676, %v1669, %v1673
        %v1678 = vand.u32 2147483647, %v1596
        %vm1679 = vcmp.eq.f32.partialorder %v1678, 8.507059e+37
        %v1680 = vand.u32 %v1596, 2147483648
        %v1681 = vor.u32 1.1754944e-38, %v1680
        %v1682 = vsel %vm1679, %v1681, %v1677
        %v1683 = vrcp.pop %v1597
        %v1684 = vmul.f32 %v1597, %v1683
        %v1685 = vsub.f32 1.0, %v1684
        %v1686 = vmul.f32 %v1683, %v1685
        %v1687 = vadd.f32 %v1683, %v1686
        %vm1688 = vweird.f32 %v1597
        %vm1689 = vweird.f32 %v1683
        %vm1690 = vmor %vm1688, %vm1689
        %v1691 = vsel %vm1690, %v1683, %v1687
        %v1692 = vand.u32 2147483647, %v1597
        %vm1693 = vcmp.eq.f32.partialorder %v1692, 8.507059e+37
        %v1694 = vand.u32 %v1597, 2147483648
        %v1695 = vor.u32 1.1754944e-38, %v1694
        %v1696 = vsel %vm1693, %v1695, %v1691
        %v1697 = vrcp.pop %v1598
        %v1698 = vmul.f32 %v1598, %v1697
        %v1699 = vsub.f32 1.0, %v1698
        %v1700 = vmul.f32 %v1697, %v1699
        %v1701 = vadd.f32 %v1697, %v1700
        %vm1702 = vweird.f32 %v1598
        %vm1703 = vweird.f32 %v1697
        %vm1704 = vmor %vm1702, %vm1703
        %v1705 = vsel %vm1704, %v1697, %v1701
        %v1706 = vand.u32 2147483647, %v1598
        %vm1707 = vcmp.eq.f32.partialorder %v1706, 8.507059e+37
        %v1708 = vand.u32 %v1598, 2147483648
        %v1709 = vor.u32 1.1754944e-38, %v1708
        %v1710 = vsel %vm1707, %v1709, %v1705
        %v1711 = vpack.c.bf16 %v1626, %v1612
        %v1712 = vpack.c.bf16 %v1654, %v1640
        %v1713 = vpack.c.bf16 %v1682, %v1668
        %v1714 = vpack.c.bf16 %v1710, %v1696
        %1715 = vst [vmem:[%s519] sm:$0xff] %v1711
        %1716 = vst [vmem:[%s519 + $0x8] sm:$0xff] %v1712
        %1717 = vst [vmem:[%s519 + $0x10] sm:$0xff] %v1713
        %1718 = vst [vmem:[%s519 + $0x18] sm:$0xff] %v1714
        %1719 = vst [vmem:[%s526] sm:$0xff] %v1068
        %1720 = vst [vmem:[%s526 + $0x8] sm:$0xff] %v1106
        %1721 = vst [vmem:[%s526 + $0x10] sm:$0xff] %v1070
        %1722 = vst [vmem:[%s526 + $0x18] sm:$0xff] %v1108
        %1723 = vst [vmem:[%s526 + $0x20] sm:$0xff] %v1073
        %1724 = vst [vmem:[%s526 + $0x28] sm:$0xff] %v1111
        %1725 = vst [vmem:[%s526 + $0x30] sm:$0xff] %v1075
        %1726 = vst [vmem:[%s526 + $0x38] sm:$0xff] %v1113
        %s1727 = sand.u32 %s265, 1
        %s1728 = scalar_lea.sflag [#allocation4], %s1727
        %s1729 = sand.u32 %s265, 1
        %s1730 = smul.addr %s1729, 32
        %s1731 = scalar_lea.vmem [#allocation13], %s1730
        %s1732 = sand.u32 %s291, 1
        %s1733 = scalar_lea.sflag [#allocation15], %s1732
        %s1734 = sand.u32 %s291, 1
        %s1735 = smul.addr %s1734, 64
        %s1736 = scalar_lea.vmem [#allocation14], %s1735
        // Predicated region
        $region85: #{tpu_custom_call.1} parent=59 // pred_check
          %p1737 = pneg %p275
        $region86: #{tpu_custom_call.1} parent=59 // pred_check_branch
          %1739 = sbr.rel (%p1737) target = $region88
        $region87: #{tpu_custom_call.1} parent=59 // pred_region
          %s1740 = smul.u32 4, %s37
          %1742 = vsyncadd %s1728, 0
          %s1743 = smul.addr %s1740, 2
          %s1744 = smul.addr %s1743, 4
          %s1745 = scalar_lea.hbm %s10, %s1744
          %s1746 = sshll.u32 %s1731, 4
          %s1747 = int_to_ptr.vmem [resolvable:$true] %s1746
          %s1748 = sshll.u32 %s1745, 4
          %s1749 = int_to_ptr.hbm [resolvable:$true] %s1748
          %1754 = dma.vmem_to_hbm [thread:$0]  %s1747, 512, %s1749, %s1728, 128, 128, 8
        $region88: #{tpu_custom_call.1} parent=59 // pred_fallthru
          _
        // Predicated region
        $region89: #{tpu_custom_call.1} parent=59 // pred_check
          %p1755 = pneg %p301
        $region90: #{tpu_custom_call.1} parent=59 // pred_check_branch
          %1757 = sbr.rel (%p1755) target = $region92
        $region91: #{tpu_custom_call.1} parent=59 // pred_region
          %s1758 = smul.u32 4, %s37
          %1760 = vsyncadd %s1733, 0
          %s1761 = smul.addr %s1758, 2
          %s1762 = smul.addr %s1761, 8
          %s1763 = scalar_lea.hbm %s11, %s1762
          %s1764 = sshll.u32 %s1736, 4
          %s1765 = int_to_ptr.vmem [resolvable:$true] %s1764
          %s1766 = sshll.u32 %s1763, 4
          %s1767 = int_to_ptr.hbm [resolvable:$true] %s1766
          %1772 = dma.vmem_to_hbm [thread:$0]  %s1765, 1024, %s1767, %s1733, 256, 256, 16
        $region92: #{tpu_custom_call.1} parent=59 // pred_fallthru
          _
      $region60: #{tpu_custom_call.1} parent=5 // pred_fallthru
        _
      %p1773 = scmp.le.s32.totalorder 2, %s32
      // Predicated region
      $region93: #{tpu_custom_call.1} parent=5 // pred_check
        %p1774 = pneg %p1773
      $region94: #{tpu_custom_call.1} parent=5 // pred_check_branch
        %1776 = sbr.rel (%p1774) target = $region96
      $region95: #{tpu_custom_call.1} parent=5 // pred_region
        %s1777 = ssub.s32 %s32, 2
        // Predicated region
        $region97: #{tpu_custom_call.1} parent=95 // pred_check
          %p1778 = pneg %p281
        $region98: #{tpu_custom_call.1} parent=95 // pred_check_branch
          %1780 = sbr.rel (%p1778) target = $region100
        $region99: #{tpu_custom_call.1} parent=95 // pred_region
          %s1781 = sand.u32 %s266, 1
          %s1782 = scalar_lea.sflag [#allocation4], %s1781
          %s1783 = sand.u32 %s266, 1
          %s1784 = smul.addr %s1783, 32
          %s1785 = scalar_lea.vmem [#allocation13], %s1784
          %1787 = dma.done %s1782, 512
        $region100: #{tpu_custom_call.1} parent=95 // pred_fallthru
          _
        // Predicated region
        $region101: #{tpu_custom_call.1} parent=95 // pred_check
          %p1788 = pneg %p307
        $region102: #{tpu_custom_call.1} parent=95 // pred_check_branch
          %1790 = sbr.rel (%p1788) target = $region104
        $region103: #{tpu_custom_call.1} parent=95 // pred_region
          %s1791 = sand.u32 %s292, 1
          %s1792 = scalar_lea.sflag [#allocation15], %s1791
          %s1793 = sand.u32 %s292, 1
          %s1794 = smul.addr %s1793, 64
          %s1795 = scalar_lea.vmem [#allocation14], %s1794
          %1797 = dma.done %s1792, 1024
        $region104: #{tpu_custom_call.1} parent=95 // pred_fallthru
          _
      $region96: #{tpu_custom_call.1} parent=5 // pred_fallthru
        _
    $region6: #{tpu_custom_call.1} parent=1 // loop_footer
      %s36 = sadd.s32 1, %s32
    $region7: #{tpu_custom_call.1} parent=1 // loop_footer_branch
      %31 = sbr.rel target = $region3
    $region8: #{tpu_custom_call.1} parent=1 // loop_exit
      _
    %1798 = vsyncpa [#allocation3], 1
    %s1799 = scalar_lea.sflag [#allocation3], 1
    %1800 = vsyncpa %s1799, 1
    %1801 = vsyncpa [#allocation6], 1
    %s1802 = scalar_lea.sflag [#allocation6], 1
    %1803 = vsyncpa %s1802, 1
    %1804 = vsyncpa [#allocation9], 1
    %1805 = vsyncpa [#allocation12], 1
    %1806 = vsyncpa [#allocation4], 1
    %s1807 = scalar_lea.sflag [#allocation4], 1
    %1808 = vsyncpa %s1807, 1
    %1809 = vsyncpa [#allocation15], 1
    %s1810 = scalar_lea.sflag [#allocation15], 1
    %1811 = vsyncpa %s1810, 1

</llo_original>
